<compile_context>
chip_gen: v5e
topology: v5e:2x2
jax: 0.10.0
libtpu: 0.0.40
codegen_flags: <defaults>
</compile_context>

<pallas_src>
import functools

import jax
import jax.numpy as jnp
from jax import lax
from jax.experimental import pallas as pl
from jax.experimental.pallas import tpu as pltpu


# ----------------------------- fused forward kernel -----------------------------
def _fused_text_sirnn_kernel(num_layers, seq_len, batch, emb_ref, *refs):
    """Ref layout (inputs, then output, then scratch):
         emb_ref            (S*B, E)              flattened embedded sequence (row = t*B + b)
         wih_refs[0..L-1]   (E or H, 4H)          input-hidden weights (transposed)
         whh_refs[0..L-1]   (H, 4H)               hidden-hidden weights (transposed)
         bias_refs[0..L-1]  (1, 4H)               b_ih + b_hh
         fcw_ref            (L*H, C)              fc weight (transposed)
         fcb_ref            (1, C)                fc bias
         o_ref              (B, C)                log-probs (output)
         seq_sc             (S, B, H)   VMEM      layer-l out_seq, reused in place across layers
         g_sc               (S, B, 4H)  VMEM      hoisted input projection of the current layer
    """
    L, S, B = num_layers, seq_len, batch
    wih_refs = refs[0:L]
    whh_refs = refs[L:2 * L]
    bias_refs = refs[2 * L:3 * L]
    fcw_ref = refs[3 * L]
    fcb_ref = refs[3 * L + 1]
    o_ref = refs[3 * L + 2]
    seq_sc = refs[3 * L + 3]
    g_sc = refs[3 * L + 4]

    H = whh_refs[0].shape[0]

    h_finals = []
    for l in range(L):
        # Hoisted input projection for the whole sequence: one big matmul on the MXU.
        if l == 0:
            layer_in = emb_ref[...]                      # (S*B, E)
        else:
            layer_in = seq_sc[...].reshape(S * B, H)     # tile-aligned view of previous out_seq
        g = (jnp.dot(layer_in, wih_refs[l][...], preferred_element_type=jnp.float32)
             + bias_refs[l][...])                        # (S*B, 4H)
        g_sc[...] = g.reshape(S, B, 4 * H)
        whh = whh_refs[l][...]                           # (H, 4H)

        def step(t, carry, _l=l, _whh=whh):
            h, c = carry
            # Leading-axis index: no dynamic sublane-offset slices in the recurrence.
            gates = g_sc[t] + jnp.dot(h, _whh, preferred_element_type=jnp.float32)  # (B, 4H) i,f,g,o
            # Full-width activation passes (one sigmoid + one tanh over all 4H lanes).
            sig = jax.nn.sigmoid(gates)
            th = jnp.tanh(gates)
            i_g = sig[:, 0 * H:1 * H]
            f_g = sig[:, 1 * H:2 * H]
            g_g = th[:, 2 * H:3 * H]
            o_g = sig[:, 3 * H:4 * H]
            c_new = f_g * c + i_g * g_g
            h_new = o_g * jnp.tanh(c_new)
            if _l < L - 1:
                # out_seq of this layer is only needed as the next layer's input:
                # keep it resident in VMEM, never write it to HBM.
                seq_sc[t] = h_new
            return h_new, c_new

        h0 = jnp.zeros((B, H), jnp.float32)
        c0 = jnp.zeros((B, H), jnp.float32)
        # S is a small static trip count -> fully unroll for LLO scheduling visibility.
        h_fin, _ = lax.fori_loop(0, S, step, (h0, c0), unroll=True)
        h_finals.append(h_fin)

    # Head: cat(h_n over layers) @ W_fc^T + b  ==  sum_l h_n[l] @ W_fc[:, l*H:(l+1)*H]^T + b
    y = fcb_ref[...]
    for l in range(L):
        y = y + jnp.dot(h_finals[l], fcw_ref[l * H:(l + 1) * H, :],
                        preferred_element_type=jnp.float32)
    # LayerNorm over last dim, elementwise_affine=False, eps=1e-5
    mean = jnp.mean(y, axis=-1, keepdims=True)
    var = jnp.mean((y - mean) ** 2, axis=-1, keepdims=True)
    yn = (y - mean) * lax.rsqrt(var + 1e-5)
    # LogSoftmax over last dim
    m = jnp.max(yn, axis=-1, keepdims=True)
    z = yn - m
    o_ref[...] = z - jnp.log(jnp.sum(jnp.exp(z), axis=-1, keepdims=True))


def text_sirnn_fused(emb_flat, lstm_params, fc_w_t, fc_b, *, seq_len, batch):
    """emb_flat: (S*B, E) f32; lstm_params: list of {w_ih_t, w_hh_t, bias};
    fc_w_t: (L*H, C); fc_b: (1, C). Returns (B, C) log-probs. batch must be a multiple of 8."""
    L = len(lstm_params)
    H = lstm_params[0]["w_hh_t"].shape[0]
    E = emb_flat.shape[1]
    C = fc_w_t.shape[1]
    S, B = seq_len, batch
    assert B % 8 == 0, "batch (after padding) must be a multiple of 8 sublanes"

    inputs = (
        [emb_flat]
        + [p["w_ih_t"] for p in lstm_params]
        + [p["w_hh_t"] for p in lstm_params]
        + [p["bias"] for p in lstm_params]
        + [fc_w_t, fc_b]
    )

    # Advisory cost estimate for the XLA scheduler.
    flops = 0
    for l in range(L):
        K = E if l == 0 else H
        flops += 2 * S * B * K * 4 * H          # hoisted input projection
        flops += 2 * S * B * H * 4 * H          # recurrence h @ W_hh
    flops += 2 * B * (L * H) * C                # fc head
    transcendentals = L * S * B * 9 * H         # sigmoid(4H) + tanh(4H) + tanh(H) per step
    bytes_accessed = sum(int(a.size) * a.dtype.itemsize for a in inputs) + B * C * 4
    cost = pl.CostEstimate(flops=flops, transcendentals=transcendentals,
                           bytes_accessed=bytes_accessed)

    vmem_spec = pl.BlockSpec(memory_space=pltpu.MemorySpace.VMEM)
    kernel = functools.partial(_fused_text_sirnn_kernel, L, S, B)
    return pl.pallas_call(
        kernel,
        out_shape=jax.ShapeDtypeStruct((B, C), jnp.float32),
        in_specs=[vmem_spec] * len(inputs),
        out_specs=vmem_spec,
        scratch_shapes=[
            pltpu.VMEM((S, B, H), jnp.float32),        # inter-layer out_seq (reused in place)
            pltpu.VMEM((S, B, 4 * H), jnp.float32),    # hoisted input projection, current layer
        ],
        compiler_params=pltpu.CompilerParams(vmem_limit_bytes=32 * 1024 * 1024),
        cost_estimate=cost,
    )(*inputs)


# ----------------------------- full forward -----------------------------
@jax.jit
def text_sirnn_forward(tokens, params):
    # tokens: (S, B) int32 (torchtext / nn.LSTM batch_first=False convention)
    S, B = tokens.shape
    Bp = ((B + 7) // 8) * 8
    if Bp != B:
        # pad batch up to a sublane multiple; padded columns are computed and discarded
        tokens = jnp.pad(tokens, ((0, 0), (0, Bp - B)))
    # embedding lookup (glue, plain JAX gather); row = t*B + b
    emb = jnp.take(params["embedding"], tokens.reshape(-1), axis=0).astype(jnp.float32)
    out = text_sirnn_fused(emb, params["lstm"], params["fc_w_t"], params["fc_b"],
                           seq_len=S, batch=Bp)
    return out[:B]


# ----------------------------- pure-JAX reference (for verification) -----------------------------
def _reference_forward(tokens, params):
    S, B = tokens.shape
    hp = jax.lax.Precision.HIGHEST
    x = jnp.take(params["embedding"], tokens.reshape(-1), axis=0).astype(jnp.float32)
    x = x.reshape(S, B, -1)
    h_finals = []
    for p in params["lstm"]:
        w_ih_t, w_hh_t, bias = p["w_ih_t"], p["w_hh_t"], p["bias"][0]
        H = w_hh_t.shape[0]
        h = jnp.zeros((B, H), jnp.float32)
        c = jnp.zeros((B, H), jnp.float32)
        outs = []
        for t in range(S):
            gates = (jnp.dot(x[t], w_ih_t, precision=hp)
                     + jnp.dot(h, w_hh_t, precision=hp) + bias)
            i_g = jax.nn.sigmoid(gates[:, 0 * H:1 * H])
            f_g = jax.nn.sigmoid(gates[:, 1 * H:2 * H])
            g_g = jnp.tanh(gates[:, 2 * H:3 * H])
            o_g = jax.nn.sigmoid(gates[:, 3 * H:4 * H])
            c = f_g * c + i_g * g_g
            h = o_g * jnp.tanh(c)
            outs.append(h)
        x = jnp.stack(outs, axis=0)
        h_finals.append(h)
    feat = jnp.concatenate(h_finals, axis=1)
    y = jnp.dot(feat, params["fc_w_t"], precision=hp) + params["fc_b"][0]
    mean = jnp.mean(y, axis=-1, keepdims=True)
    var = jnp.mean((y - mean) ** 2, axis=-1, keepdims=True)
    yn = (y - mean) / jnp.sqrt(var + 1e-5)
    return jax.nn.log_softmax(yn, axis=-1)


# ----------------------------- param init -----------------------------
def init_params(key, vocab_size, embed_size, hidden_size, num_layers, output_size):
    ks = jax.random.split(key, 2 + 4 * num_layers)
    params = {}
    params["embedding"] = jax.random.normal(ks[0], (vocab_size, embed_size), jnp.float32) * 0.1

    lstm_layers = []
    k_idx = 1
    bound = 1.0 / jnp.sqrt(hidden_size)
    for l in range(num_layers):
        in_size = embed_size if l == 0 else hidden_size
        w_ih = jax.random.uniform(ks[k_idx + 0], (4 * hidden_size, in_size), jnp.float32, -bound, bound)
        w_hh = jax.random.uniform(ks[k_idx + 1], (4 * hidden_size, hidden_size), jnp.float32, -bound, bound)
        b_ih = jax.random.uniform(ks[k_idx + 2], (4 * hidden_size,), jnp.float32, -bound, bound)
        b_hh = jax.random.uniform(ks[k_idx + 3], (4 * hidden_size,), jnp.float32, -bound, bound)
        k_idx += 4
        lstm_layers.append({
            "w_ih_t": w_ih.T,                  # (in, 4H)
            "w_hh_t": w_hh.T,                  # (H, 4H)
            "bias": (b_ih + b_hh)[None, :],    # (1, 4H)
        })
    params["lstm"] = lstm_layers

    fc_in = hidden_size * num_layers  # unidirectional
    fb = 1.0 / jnp.sqrt(fc_in)
    fc_w = jax.random.uniform(ks[k_idx], (output_size, fc_in), jnp.float32, -fb, fb)
    fc_b = jax.random.uniform(ks[-1], (output_size,), jnp.float32, -fb, fb)
    params["fc_w_t"] = fc_w.T          # (F, C)
    params["fc_b"] = fc_b[None, :]     # (1, C)
    return params


if __name__ == "__main__":
    # Small config consistent with the module: AG News -> 4 classes.
    VOCAB = 50
    EMBED = 32
    HIDDEN = 32
    LAYERS = 2
    OUTPUT = 4
    SEQ = 8
    BATCH = 8

    key = jax.random.PRNGKey(0)
    k_tok, k_par = jax.random.split(key)
    tokens = jax.random.randint(k_tok, (SEQ, BATCH), 0, VOCAB, dtype=jnp.int32)  # (S, B)
    params = init_params(k_par, VOCAB, EMBED, HIDDEN, LAYERS, OUTPUT)

    logprobs = text_sirnn_forward(tokens, params)
    jax.block_until_ready(logprobs)
    assert logprobs.shape == (BATCH, OUTPUT)

    # Check against a pure-JAX reference of the same math (tolerant of MXU precision).
    ref = _reference_forward(tokens, params)
    assert bool(jnp.allclose(logprobs, ref, atol=2e-2, rtol=2e-2)), (
        "kernel/ref mismatch: max abs diff = %f" % float(jnp.max(jnp.abs(logprobs - ref))))
    # log-softmax rows should (approximately) exponentiate-sum to 1
    row_sums = jnp.sum(jnp.exp(logprobs), axis=-1)
    assert bool(jnp.all(jnp.abs(row_sums - 1.0) < 1e-3))
    print("KERNEL_OK")
</pallas_src>

<mosaic_0001>
module attributes {stable_mosaic.version = 11 : i64} {
  func.func @_fused_text_sirnn_kernel(%arg0: memref<64x32xf32, #tpu.memory_space<vmem>>, %arg1: memref<32x128xf32, #tpu.memory_space<vmem>>, %arg2: memref<32x128xf32, #tpu.memory_space<vmem>>, %arg3: memref<32x128xf32, #tpu.memory_space<vmem>>, %arg4: memref<32x128xf32, #tpu.memory_space<vmem>>, %arg5: memref<1x128xf32, #tpu.memory_space<vmem>>, %arg6: memref<1x128xf32, #tpu.memory_space<vmem>>, %arg7: memref<64x4xf32, #tpu.memory_space<vmem>>, %arg8: memref<1x4xf32, #tpu.memory_space<vmem>>, %arg9: memref<8x4xf32, #tpu.memory_space<vmem>>, %arg10: memref<8x8x32xf32, #tpu.memory_space<vmem>>, %arg11: memref<8x8x128xf32, #tpu.memory_space<vmem>>) attributes {dimension_semantics = [], scalar_prefetch = 0 : i64, scratch_operands = 2 : i64, tpu.core_type = #tpu.core_type<tc>} {
    %c0 = arith.constant 0 : index
    %c0_0 = arith.constant 0 : index
    %0 = vector.load %arg0[%c0, %c0_0] : memref<64x32xf32, #tpu.memory_space<vmem>>, vector<64x32xf32>
    %c0_1 = arith.constant 0 : index
    %c0_2 = arith.constant 0 : index
    %1 = vector.load %arg1[%c0_1, %c0_2] : memref<32x128xf32, #tpu.memory_space<vmem>>, vector<32x128xf32>
    %cst = arith.constant dense<0.000000e+00> : vector<64x128xf32>
    %2 = tpu.matmul %0, %1, %cst {dimension_numbers = #tpu.dot_dimension_numbers<[1], [0], [0], [1], [0, 0, 1, 1], [], []>} : vector<64x32xf32>, vector<32x128xf32>, vector<64x128xf32> -> vector<64x128xf32>
    %c0_3 = arith.constant 0 : index
    %c0_4 = arith.constant 0 : index
    %3 = vector.load %arg5[%c0_3, %c0_4] : memref<1x128xf32, #tpu.memory_space<vmem>>, vector<1x128xf32>
    %4 = vector.broadcast %3 : vector<1x128xf32> to vector<64x128xf32>
    %5 = arith.addf %2, %4 : vector<64x128xf32>
    %6 = vector.shape_cast %5 : vector<64x128xf32> to vector<8x8x128xf32>
    %c0_5 = arith.constant 0 : index
    %c0_6 = arith.constant 0 : index
    %c0_7 = arith.constant 0 : index
    %7 = vector.load %arg11[%c0_5, %c0_6, %c0_7] : memref<8x8x128xf32, #tpu.memory_space<vmem>>, vector<8x8x128xf32>
    tpu.vector_store %arg11[%c0_5, %c0_6, %c0_7], %6 {strides = array<i32>} : memref<8x8x128xf32, #tpu.memory_space<vmem>>, vector<8x8x128xf32>,
    %c0_8 = arith.constant 0 : index
    %c0_9 = arith.constant 0 : index
    %8 = vector.load %arg3[%c0_8, %c0_9] : memref<32x128xf32, #tpu.memory_space<vmem>>, vector<32x128xf32>
    %cst_10 = arith.constant 0.000000e+00 : f32
    %9 = vector.broadcast %cst_10 : f32 to vector<8x32xf32>
    %cst_11 = arith.constant 0.000000e+00 : f32
    %10 = vector.broadcast %cst_11 : f32 to vector<8x32xf32>
    %c0_i32 = arith.constant 0 : i32
    %11 = arith.index_cast %c0_i32 : i32 to index
    %c0_12 = arith.constant 0 : index
    %c0_13 = arith.constant 0 : index
    %12 = vector.load %arg11[%11, %c0_12, %c0_13] : memref<8x8x128xf32, #tpu.memory_space<vmem>>, vector<1x8x128xf32>
    %13 = vector.shape_cast %12 : vector<1x8x128xf32> to vector<8x128xf32>
    %cst_14 = arith.constant dense<0.000000e+00> : vector<8x128xf32>
    %14 = tpu.matmul %9, %8, %cst_14 {dimension_numbers = #tpu.dot_dimension_numbers<[1], [0], [0], [1], [0, 0, 1, 1], [], []>} : vector<8x32xf32>, vector<32x128xf32>, vector<8x128xf32> -> vector<8x128xf32>
    %15 = arith.addf %13, %14 : vector<8x128xf32>
    %16 = arith.negf %15 : vector<8x128xf32>
    %17 = math.exp %16 : vector<8x128xf32>
    %cst_15 = arith.constant 1.000000e+00 : f32
    %18 = vector.broadcast %cst_15 : f32 to vector<8x128xf32>
    %19 = arith.addf %18, %17 : vector<8x128xf32>
    %20 = arith.divf %18, %19 : vector<8x128xf32>
    %21 = math.tanh %15 : vector<8x128xf32>
    %22 = vector.extract_strided_slice %20 {offsets = [0, 0], sizes = [8, 32], strides = [1, 1]} : vector<8x128xf32> to vector<8x32xf32>
    %23 = vector.extract_strided_slice %20 {offsets = [0, 32], sizes = [8, 32], strides = [1, 1]} : vector<8x128xf32> to vector<8x32xf32>
    %24 = vector.extract_strided_slice %21 {offsets = [0, 64], sizes = [8, 32], strides = [1, 1]} : vector<8x128xf32> to vector<8x32xf32>
    %25 = vector.extract_strided_slice %20 {offsets = [0, 96], sizes = [8, 32], strides = [1, 1]} : vector<8x128xf32> to vector<8x32xf32>
    %26 = arith.mulf %23, %10 : vector<8x32xf32>
    %27 = arith.mulf %22, %24 : vector<8x32xf32>
    %28 = arith.addf %26, %27 : vector<8x32xf32>
    %29 = math.tanh %28 : vector<8x32xf32>
    %30 = arith.mulf %25, %29 : vector<8x32xf32>
    %31 = arith.index_cast %c0_i32 : i32 to index
    %c0_16 = arith.constant 0 : index
    %c0_17 = arith.constant 0 : index
    %32 = vector.load %arg10[%31, %c0_16, %c0_17] : memref<8x8x32xf32, #tpu.memory_space<vmem>>, vector<1x8x32xf32>
    %33 = vector.shape_cast %32 : vector<1x8x32xf32> to vector<8x32xf32>
    %34 = vector.shape_cast %30 : vector<8x32xf32> to vector<1x8x32xf32>
    tpu.vector_store %arg10[%31, %c0_16, %c0_17], %34 {strides = array<i32>} : memref<8x8x32xf32, #tpu.memory_space<vmem>>, vector<1x8x32xf32>,
    %c1_i32 = arith.constant 1 : i32
    %35 = arith.index_cast %c1_i32 : i32 to index
    %c0_18 = arith.constant 0 : index
    %c0_19 = arith.constant 0 : index
    %36 = vector.load %arg11[%35, %c0_18, %c0_19] : memref<8x8x128xf32, #tpu.memory_space<vmem>>, vector<1x8x128xf32>
    %37 = vector.shape_cast %36 : vector<1x8x128xf32> to vector<8x128xf32>
    %cst_20 = arith.constant dense<0.000000e+00> : vector<8x128xf32>
    %38 = tpu.matmul %30, %8, %cst_20 {dimension_numbers = #tpu.dot_dimension_numbers<[1], [0], [0], [1], [0, 0, 1, 1], [], []>} : vector<8x32xf32>, vector<32x128xf32>, vector<8x128xf32> -> vector<8x128xf32>
    %39 = arith.addf %37, %38 : vector<8x128xf32>
    %40 = arith.negf %39 : vector<8x128xf32>
    %41 = math.exp %40 : vector<8x128xf32>
    %cst_21 = arith.constant 1.000000e+00 : f32
    %42 = vector.broadcast %cst_21 : f32 to vector<8x128xf32>
    %43 = arith.addf %42, %41 : vector<8x128xf32>
    %44 = arith.divf %42, %43 : vector<8x128xf32>
    %45 = math.tanh %39 : vector<8x128xf32>
    %46 = vector.extract_strided_slice %44 {offsets = [0, 0], sizes = [8, 32], strides = [1, 1]} : vector<8x128xf32> to vector<8x32xf32>
    %47 = vector.extract_strided_slice %44 {offsets = [0, 32], sizes = [8, 32], strides = [1, 1]} : vector<8x128xf32> to vector<8x32xf32>
    %48 = vector.extract_strided_slice %45 {offsets = [0, 64], sizes = [8, 32], strides = [1, 1]} : vector<8x128xf32> to vector<8x32xf32>
    %49 = vector.extract_strided_slice %44 {offsets = [0, 96], sizes = [8, 32], strides = [1, 1]} : vector<8x128xf32> to vector<8x32xf32>
    %50 = arith.mulf %47, %28 : vector<8x32xf32>
    %51 = arith.mulf %46, %48 : vector<8x32xf32>
    %52 = arith.addf %50, %51 : vector<8x32xf32>
    %53 = math.tanh %52 : vector<8x32xf32>
    %54 = arith.mulf %49, %53 : vector<8x32xf32>
    %55 = arith.index_cast %c1_i32 : i32 to index
    %c0_22 = arith.constant 0 : index
    %c0_23 = arith.constant 0 : index
    %56 = vector.load %arg10[%55, %c0_22, %c0_23] : memref<8x8x32xf32, #tpu.memory_space<vmem>>, vector<1x8x32xf32>
    %57 = vector.shape_cast %56 : vector<1x8x32xf32> to vector<8x32xf32>
    %58 = vector.shape_cast %54 : vector<8x32xf32> to vector<1x8x32xf32>
    tpu.vector_store %arg10[%55, %c0_22, %c0_23], %58 {strides = array<i32>} : memref<8x8x32xf32, #tpu.memory_space<vmem>>, vector<1x8x32xf32>,
    %c2_i32 = arith.constant 2 : i32
    %59 = arith.index_cast %c2_i32 : i32 to index
    %c0_24 = arith.constant 0 : index
    %c0_25 = arith.constant 0 : index
    %60 = vector.load %arg11[%59, %c0_24, %c0_25] : memref<8x8x128xf32, #tpu.memory_space<vmem>>, vector<1x8x128xf32>
    %61 = vector.shape_cast %60 : vector<1x8x128xf32> to vector<8x128xf32>
    %cst_26 = arith.constant dense<0.000000e+00> : vector<8x128xf32>
    %62 = tpu.matmul %54, %8, %cst_26 {dimension_numbers = #tpu.dot_dimension_numbers<[1], [0], [0], [1], [0, 0, 1, 1], [], []>} : vector<8x32xf32>, vector<32x128xf32>, vector<8x128xf32> -> vector<8x128xf32>
    %63 = arith.addf %61, %62 : vector<8x128xf32>
    %64 = arith.negf %63 : vector<8x128xf32>
    %65 = math.exp %64 : vector<8x128xf32>
    %cst_27 = arith.constant 1.000000e+00 : f32
    %66 = vector.broadcast %cst_27 : f32 to vector<8x128xf32>
    %67 = arith.addf %66, %65 : vector<8x128xf32>
    %68 = arith.divf %66, %67 : vector<8x128xf32>
    %69 = math.tanh %63 : vector<8x128xf32>
    %70 = vector.extract_strided_slice %68 {offsets = [0, 0], sizes = [8, 32], strides = [1, 1]} : vector<8x128xf32> to vector<8x32xf32>
    %71 = vector.extract_strided_slice %68 {offsets = [0, 32], sizes = [8, 32], strides = [1, 1]} : vector<8x128xf32> to vector<8x32xf32>
    %72 = vector.extract_strided_slice %69 {offsets = [0, 64], sizes = [8, 32], strides = [1, 1]} : vector<8x128xf32> to vector<8x32xf32>
    %73 = vector.extract_strided_slice %68 {offsets = [0, 96], sizes = [8, 32], strides = [1, 1]} : vector<8x128xf32> to vector<8x32xf32>
    %74 = arith.mulf %71, %52 : vector<8x32xf32>
    %75 = arith.mulf %70, %72 : vector<8x32xf32>
    %76 = arith.addf %74, %75 : vector<8x32xf32>
    %77 = math.tanh %76 : vector<8x32xf32>
    %78 = arith.mulf %73, %77 : vector<8x32xf32>
    %79 = arith.index_cast %c2_i32 : i32 to index
    %c0_28 = arith.constant 0 : index
    %c0_29 = arith.constant 0 : index
    %80 = vector.load %arg10[%79, %c0_28, %c0_29] : memref<8x8x32xf32, #tpu.memory_space<vmem>>, vector<1x8x32xf32>
    %81 = vector.shape_cast %80 : vector<1x8x32xf32> to vector<8x32xf32>
    %82 = vector.shape_cast %78 : vector<8x32xf32> to vector<1x8x32xf32>
    tpu.vector_store %arg10[%79, %c0_28, %c0_29], %82 {strides = array<i32>} : memref<8x8x32xf32, #tpu.memory_space<vmem>>, vector<1x8x32xf32>,
    %c3_i32 = arith.constant 3 : i32
    %83 = arith.index_cast %c3_i32 : i32 to index
    %c0_30 = arith.constant 0 : index
    %c0_31 = arith.constant 0 : index
    %84 = vector.load %arg11[%83, %c0_30, %c0_31] : memref<8x8x128xf32, #tpu.memory_space<vmem>>, vector<1x8x128xf32>
    %85 = vector.shape_cast %84 : vector<1x8x128xf32> to vector<8x128xf32>
    %cst_32 = arith.constant dense<0.000000e+00> : vector<8x128xf32>
    %86 = tpu.matmul %78, %8, %cst_32 {dimension_numbers = #tpu.dot_dimension_numbers<[1], [0], [0], [1], [0, 0, 1, 1], [], []>} : vector<8x32xf32>, vector<32x128xf32>, vector<8x128xf32> -> vector<8x128xf32>
    %87 = arith.addf %85, %86 : vector<8x128xf32>
    %88 = arith.negf %87 : vector<8x128xf32>
    %89 = math.exp %88 : vector<8x128xf32>
    %cst_33 = arith.constant 1.000000e+00 : f32
    %90 = vector.broadcast %cst_33 : f32 to vector<8x128xf32>
    %91 = arith.addf %90, %89 : vector<8x128xf32>
    %92 = arith.divf %90, %91 : vector<8x128xf32>
    %93 = math.tanh %87 : vector<8x128xf32>
    %94 = vector.extract_strided_slice %92 {offsets = [0, 0], sizes = [8, 32], strides = [1, 1]} : vector<8x128xf32> to vector<8x32xf32>
    %95 = vector.extract_strided_slice %92 {offsets = [0, 32], sizes = [8, 32], strides = [1, 1]} : vector<8x128xf32> to vector<8x32xf32>
    %96 = vector.extract_strided_slice %93 {offsets = [0, 64], sizes = [8, 32], strides = [1, 1]} : vector<8x128xf32> to vector<8x32xf32>
    %97 = vector.extract_strided_slice %92 {offsets = [0, 96], sizes = [8, 32], strides = [1, 1]} : vector<8x128xf32> to vector<8x32xf32>
    %98 = arith.mulf %95, %76 : vector<8x32xf32>
    %99 = arith.mulf %94, %96 : vector<8x32xf32>
    %100 = arith.addf %98, %99 : vector<8x32xf32>
    %101 = math.tanh %100 : vector<8x32xf32>
    %102 = arith.mulf %97, %101 : vector<8x32xf32>
    %103 = arith.index_cast %c3_i32 : i32 to index
    %c0_34 = arith.constant 0 : index
    %c0_35 = arith.constant 0 : index
    %104 = vector.load %arg10[%103, %c0_34, %c0_35] : memref<8x8x32xf32, #tpu.memory_space<vmem>>, vector<1x8x32xf32>
    %105 = vector.shape_cast %104 : vector<1x8x32xf32> to vector<8x32xf32>
    %106 = vector.shape_cast %102 : vector<8x32xf32> to vector<1x8x32xf32>
    tpu.vector_store %arg10[%103, %c0_34, %c0_35], %106 {strides = array<i32>} : memref<8x8x32xf32, #tpu.memory_space<vmem>>, vector<1x8x32xf32>,
    %c4_i32 = arith.constant 4 : i32
    %107 = arith.index_cast %c4_i32 : i32 to index
    %c0_36 = arith.constant 0 : index
    %c0_37 = arith.constant 0 : index
    %108 = vector.load %arg11[%107, %c0_36, %c0_37] : memref<8x8x128xf32, #tpu.memory_space<vmem>>, vector<1x8x128xf32>
    %109 = vector.shape_cast %108 : vector<1x8x128xf32> to vector<8x128xf32>
    %cst_38 = arith.constant dense<0.000000e+00> : vector<8x128xf32>
    %110 = tpu.matmul %102, %8, %cst_38 {dimension_numbers = #tpu.dot_dimension_numbers<[1], [0], [0], [1], [0, 0, 1, 1], [], []>} : vector<8x32xf32>, vector<32x128xf32>, vector<8x128xf32> -> vector<8x128xf32>
    %111 = arith.addf %109, %110 : vector<8x128xf32>
    %112 = arith.negf %111 : vector<8x128xf32>
    %113 = math.exp %112 : vector<8x128xf32>
    %cst_39 = arith.constant 1.000000e+00 : f32
    %114 = vector.broadcast %cst_39 : f32 to vector<8x128xf32>
    %115 = arith.addf %114, %113 : vector<8x128xf32>
    %116 = arith.divf %114, %115 : vector<8x128xf32>
    %117 = math.tanh %111 : vector<8x128xf32>
    %118 = vector.extract_strided_slice %116 {offsets = [0, 0], sizes = [8, 32], strides = [1, 1]} : vector<8x128xf32> to vector<8x32xf32>
    %119 = vector.extract_strided_slice %116 {offsets = [0, 32], sizes = [8, 32], strides = [1, 1]} : vector<8x128xf32> to vector<8x32xf32>
    %120 = vector.extract_strided_slice %117 {offsets = [0, 64], sizes = [8, 32], strides = [1, 1]} : vector<8x128xf32> to vector<8x32xf32>
    %121 = vector.extract_strided_slice %116 {offsets = [0, 96], sizes = [8, 32], strides = [1, 1]} : vector<8x128xf32> to vector<8x32xf32>
    %122 = arith.mulf %119, %100 : vector<8x32xf32>
    %123 = arith.mulf %118, %120 : vector<8x32xf32>
    %124 = arith.addf %122, %123 : vector<8x32xf32>
    %125 = math.tanh %124 : vector<8x32xf32>
    %126 = arith.mulf %121, %125 : vector<8x32xf32>
    %127 = arith.index_cast %c4_i32 : i32 to index
    %c0_40 = arith.constant 0 : index
    %c0_41 = arith.constant 0 : index
    %128 = vector.load %arg10[%127, %c0_40, %c0_41] : memref<8x8x32xf32, #tpu.memory_space<vmem>>, vector<1x8x32xf32>
    %129 = vector.shape_cast %128 : vector<1x8x32xf32> to vector<8x32xf32>
    %130 = vector.shape_cast %126 : vector<8x32xf32> to vector<1x8x32xf32>
    tpu.vector_store %arg10[%127, %c0_40, %c0_41], %130 {strides = array<i32>} : memref<8x8x32xf32, #tpu.memory_space<vmem>>, vector<1x8x32xf32>,
    %c5_i32 = arith.constant 5 : i32
    %131 = arith.index_cast %c5_i32 : i32 to index
    %c0_42 = arith.constant 0 : index
    %c0_43 = arith.constant 0 : index
    %132 = vector.load %arg11[%131, %c0_42, %c0_43] : memref<8x8x128xf32, #tpu.memory_space<vmem>>, vector<1x8x128xf32>
    %133 = vector.shape_cast %132 : vector<1x8x128xf32> to vector<8x128xf32>
    %cst_44 = arith.constant dense<0.000000e+00> : vector<8x128xf32>
    %134 = tpu.matmul %126, %8, %cst_44 {dimension_numbers = #tpu.dot_dimension_numbers<[1], [0], [0], [1], [0, 0, 1, 1], [], []>} : vector<8x32xf32>, vector<32x128xf32>, vector<8x128xf32> -> vector<8x128xf32>
    %135 = arith.addf %133, %134 : vector<8x128xf32>
    %136 = arith.negf %135 : vector<8x128xf32>
    %137 = math.exp %136 : vector<8x128xf32>
    %cst_45 = arith.constant 1.000000e+00 : f32
    %138 = vector.broadcast %cst_45 : f32 to vector<8x128xf32>
    %139 = arith.addf %138, %137 : vector<8x128xf32>
    %140 = arith.divf %138, %139 : vector<8x128xf32>
    %141 = math.tanh %135 : vector<8x128xf32>
    %142 = vector.extract_strided_slice %140 {offsets = [0, 0], sizes = [8, 32], strides = [1, 1]} : vector<8x128xf32> to vector<8x32xf32>
    %143 = vector.extract_strided_slice %140 {offsets = [0, 32], sizes = [8, 32], strides = [1, 1]} : vector<8x128xf32> to vector<8x32xf32>
    %144 = vector.extract_strided_slice %141 {offsets = [0, 64], sizes = [8, 32], strides = [1, 1]} : vector<8x128xf32> to vector<8x32xf32>
    %145 = vector.extract_strided_slice %140 {offsets = [0, 96], sizes = [8, 32], strides = [1, 1]} : vector<8x128xf32> to vector<8x32xf32>
    %146 = arith.mulf %143, %124 : vector<8x32xf32>
    %147 = arith.mulf %142, %144 : vector<8x32xf32>
    %148 = arith.addf %146, %147 : vector<8x32xf32>
    %149 = math.tanh %148 : vector<8x32xf32>
    %150 = arith.mulf %145, %149 : vector<8x32xf32>
    %151 = arith.index_cast %c5_i32 : i32 to index
    %c0_46 = arith.constant 0 : index
    %c0_47 = arith.constant 0 : index
    %152 = vector.load %arg10[%151, %c0_46, %c0_47] : memref<8x8x32xf32, #tpu.memory_space<vmem>>, vector<1x8x32xf32>
    %153 = vector.shape_cast %152 : vector<1x8x32xf32> to vector<8x32xf32>
    %154 = vector.shape_cast %150 : vector<8x32xf32> to vector<1x8x32xf32>
    tpu.vector_store %arg10[%151, %c0_46, %c0_47], %154 {strides = array<i32>} : memref<8x8x32xf32, #tpu.memory_space<vmem>>, vector<1x8x32xf32>,
    %c6_i32 = arith.constant 6 : i32
    %155 = arith.index_cast %c6_i32 : i32 to index
    %c0_48 = arith.constant 0 : index
    %c0_49 = arith.constant 0 : index
    %156 = vector.load %arg11[%155, %c0_48, %c0_49] : memref<8x8x128xf32, #tpu.memory_space<vmem>>, vector<1x8x128xf32>
    %157 = vector.shape_cast %156 : vector<1x8x128xf32> to vector<8x128xf32>
    %cst_50 = arith.constant dense<0.000000e+00> : vector<8x128xf32>
    %158 = tpu.matmul %150, %8, %cst_50 {dimension_numbers = #tpu.dot_dimension_numbers<[1], [0], [0], [1], [0, 0, 1, 1], [], []>} : vector<8x32xf32>, vector<32x128xf32>, vector<8x128xf32> -> vector<8x128xf32>
    %159 = arith.addf %157, %158 : vector<8x128xf32>
    %160 = arith.negf %159 : vector<8x128xf32>
    %161 = math.exp %160 : vector<8x128xf32>
    %cst_51 = arith.constant 1.000000e+00 : f32
    %162 = vector.broadcast %cst_51 : f32 to vector<8x128xf32>
    %163 = arith.addf %162, %161 : vector<8x128xf32>
    %164 = arith.divf %162, %163 : vector<8x128xf32>
    %165 = math.tanh %159 : vector<8x128xf32>
    %166 = vector.extract_strided_slice %164 {offsets = [0, 0], sizes = [8, 32], strides = [1, 1]} : vector<8x128xf32> to vector<8x32xf32>
    %167 = vector.extract_strided_slice %164 {offsets = [0, 32], sizes = [8, 32], strides = [1, 1]} : vector<8x128xf32> to vector<8x32xf32>
    %168 = vector.extract_strided_slice %165 {offsets = [0, 64], sizes = [8, 32], strides = [1, 1]} : vector<8x128xf32> to vector<8x32xf32>
    %169 = vector.extract_strided_slice %164 {offsets = [0, 96], sizes = [8, 32], strides = [1, 1]} : vector<8x128xf32> to vector<8x32xf32>
    %170 = arith.mulf %167, %148 : vector<8x32xf32>
    %171 = arith.mulf %166, %168 : vector<8x32xf32>
    %172 = arith.addf %170, %171 : vector<8x32xf32>
    %173 = math.tanh %172 : vector<8x32xf32>
    %174 = arith.mulf %169, %173 : vector<8x32xf32>
    %175 = arith.index_cast %c6_i32 : i32 to index
    %c0_52 = arith.constant 0 : index
    %c0_53 = arith.constant 0 : index
    %176 = vector.load %arg10[%175, %c0_52, %c0_53] : memref<8x8x32xf32, #tpu.memory_space<vmem>>, vector<1x8x32xf32>
    %177 = vector.shape_cast %176 : vector<1x8x32xf32> to vector<8x32xf32>
    %178 = vector.shape_cast %174 : vector<8x32xf32> to vector<1x8x32xf32>
    tpu.vector_store %arg10[%175, %c0_52, %c0_53], %178 {strides = array<i32>} : memref<8x8x32xf32, #tpu.memory_space<vmem>>, vector<1x8x32xf32>,
    %c7_i32 = arith.constant 7 : i32
    %179 = arith.index_cast %c7_i32 : i32 to index
    %c0_54 = arith.constant 0 : index
    %c0_55 = arith.constant 0 : index
    %180 = vector.load %arg11[%179, %c0_54, %c0_55] : memref<8x8x128xf32, #tpu.memory_space<vmem>>, vector<1x8x128xf32>
    %181 = vector.shape_cast %180 : vector<1x8x128xf32> to vector<8x128xf32>
    %cst_56 = arith.constant dense<0.000000e+00> : vector<8x128xf32>
    %182 = tpu.matmul %174, %8, %cst_56 {dimension_numbers = #tpu.dot_dimension_numbers<[1], [0], [0], [1], [0, 0, 1, 1], [], []>} : vector<8x32xf32>, vector<32x128xf32>, vector<8x128xf32> -> vector<8x128xf32>
    %183 = arith.addf %181, %182 : vector<8x128xf32>
    %184 = arith.negf %183 : vector<8x128xf32>
    %185 = math.exp %184 : vector<8x128xf32>
    %cst_57 = arith.constant 1.000000e+00 : f32
    %186 = vector.broadcast %cst_57 : f32 to vector<8x128xf32>
    %187 = arith.addf %186, %185 : vector<8x128xf32>
    %188 = arith.divf %186, %187 : vector<8x128xf32>
    %189 = math.tanh %183 : vector<8x128xf32>
    %190 = vector.extract_strided_slice %188 {offsets = [0, 0], sizes = [8, 32], strides = [1, 1]} : vector<8x128xf32> to vector<8x32xf32>
    %191 = vector.extract_strided_slice %188 {offsets = [0, 32], sizes = [8, 32], strides = [1, 1]} : vector<8x128xf32> to vector<8x32xf32>
    %192 = vector.extract_strided_slice %189 {offsets = [0, 64], sizes = [8, 32], strides = [1, 1]} : vector<8x128xf32> to vector<8x32xf32>
    %193 = vector.extract_strided_slice %188 {offsets = [0, 96], sizes = [8, 32], strides = [1, 1]} : vector<8x128xf32> to vector<8x32xf32>
    %194 = arith.mulf %191, %172 : vector<8x32xf32>
    %195 = arith.mulf %190, %192 : vector<8x32xf32>
    %196 = arith.addf %194, %195 : vector<8x32xf32>
    %197 = math.tanh %196 : vector<8x32xf32>
    %198 = arith.mulf %193, %197 : vector<8x32xf32>
    %199 = arith.index_cast %c7_i32 : i32 to index
    %c0_58 = arith.constant 0 : index
    %c0_59 = arith.constant 0 : index
    %200 = vector.load %arg10[%199, %c0_58, %c0_59] : memref<8x8x32xf32, #tpu.memory_space<vmem>>, vector<1x8x32xf32>
    %201 = vector.shape_cast %200 : vector<1x8x32xf32> to vector<8x32xf32>
    %202 = vector.shape_cast %198 : vector<8x32xf32> to vector<1x8x32xf32>
    tpu.vector_store %arg10[%199, %c0_58, %c0_59], %202 {strides = array<i32>} : memref<8x8x32xf32, #tpu.memory_space<vmem>>, vector<1x8x32xf32>,
    %c8_i32 = arith.constant 8 : i32
    %c0_60 = arith.constant 0 : index
    %c0_61 = arith.constant 0 : index
    %c0_62 = arith.constant 0 : index
    %203 = vector.load %arg10[%c0_60, %c0_61, %c0_62] : memref<8x8x32xf32, #tpu.memory_space<vmem>>, vector<8x8x32xf32>
    %204 = vector.shape_cast %203 : vector<8x8x32xf32> to vector<64x32xf32>
    %c0_63 = arith.constant 0 : index
    %c0_64 = arith.constant 0 : index
    %205 = vector.load %arg2[%c0_63, %c0_64] : memref<32x128xf32, #tpu.memory_space<vmem>>, vector<32x128xf32>
    %cst_65 = arith.constant dense<0.000000e+00> : vector<64x128xf32>
    %206 = tpu.matmul %204, %205, %cst_65 {dimension_numbers = #tpu.dot_dimension_numbers<[1], [0], [0], [1], [0, 0, 1, 1], [], []>} : vector<64x32xf32>, vector<32x128xf32>, vector<64x128xf32> -> vector<64x128xf32>
    %c0_66 = arith.constant 0 : index
    %c0_67 = arith.constant 0 : index
    %207 = vector.load %arg6[%c0_66, %c0_67] : memref<1x128xf32, #tpu.memory_space<vmem>>, vector<1x128xf32>
    %208 = vector.broadcast %207 : vector<1x128xf32> to vector<64x128xf32>
    %209 = arith.addf %206, %208 : vector<64x128xf32>
    %210 = vector.shape_cast %209 : vector<64x128xf32> to vector<8x8x128xf32>
    %c0_68 = arith.constant 0 : index
    %c0_69 = arith.constant 0 : index
    %c0_70 = arith.constant 0 : index
    %211 = vector.load %arg11[%c0_68, %c0_69, %c0_70] : memref<8x8x128xf32, #tpu.memory_space<vmem>>, vector<8x8x128xf32>
    tpu.vector_store %arg11[%c0_68, %c0_69, %c0_70], %210 {strides = array<i32>} : memref<8x8x128xf32, #tpu.memory_space<vmem>>, vector<8x8x128xf32>,
    %c0_71 = arith.constant 0 : index
    %c0_72 = arith.constant 0 : index
    %212 = vector.load %arg4[%c0_71, %c0_72] : memref<32x128xf32, #tpu.memory_space<vmem>>, vector<32x128xf32>
    %cst_73 = arith.constant 0.000000e+00 : f32
    %213 = vector.broadcast %cst_73 : f32 to vector<8x32xf32>
    %cst_74 = arith.constant 0.000000e+00 : f32
    %214 = vector.broadcast %cst_74 : f32 to vector<8x32xf32>
    %c0_i32_75 = arith.constant 0 : i32
    %215 = arith.index_cast %c0_i32_75 : i32 to index
    %c0_76 = arith.constant 0 : index
    %c0_77 = arith.constant 0 : index
    %216 = vector.load %arg11[%215, %c0_76, %c0_77] : memref<8x8x128xf32, #tpu.memory_space<vmem>>, vector<1x8x128xf32>
    %217 = vector.shape_cast %216 : vector<1x8x128xf32> to vector<8x128xf32>
    %cst_78 = arith.constant dense<0.000000e+00> : vector<8x128xf32>
    %218 = tpu.matmul %213, %212, %cst_78 {dimension_numbers = #tpu.dot_dimension_numbers<[1], [0], [0], [1], [0, 0, 1, 1], [], []>} : vector<8x32xf32>, vector<32x128xf32>, vector<8x128xf32> -> vector<8x128xf32>
    %219 = arith.addf %217, %218 : vector<8x128xf32>
    %220 = arith.negf %219 : vector<8x128xf32>
    %221 = math.exp %220 : vector<8x128xf32>
    %cst_79 = arith.constant 1.000000e+00 : f32
    %222 = vector.broadcast %cst_79 : f32 to vector<8x128xf32>
    %223 = arith.addf %222, %221 : vector<8x128xf32>
    %224 = arith.divf %222, %223 : vector<8x128xf32>
    %225 = math.tanh %219 : vector<8x128xf32>
    %226 = vector.extract_strided_slice %224 {offsets = [0, 0], sizes = [8, 32], strides = [1, 1]} : vector<8x128xf32> to vector<8x32xf32>
    %227 = vector.extract_strided_slice %224 {offsets = [0, 32], sizes = [8, 32], strides = [1, 1]} : vector<8x128xf32> to vector<8x32xf32>
    %228 = vector.extract_strided_slice %225 {offsets = [0, 64], sizes = [8, 32], strides = [1, 1]} : vector<8x128xf32> to vector<8x32xf32>
    %229 = vector.extract_strided_slice %224 {offsets = [0, 96], sizes = [8, 32], strides = [1, 1]} : vector<8x128xf32> to vector<8x32xf32>
    %230 = arith.mulf %227, %214 : vector<8x32xf32>
    %231 = arith.mulf %226, %228 : vector<8x32xf32>
    %232 = arith.addf %230, %231 : vector<8x32xf32>
    %233 = math.tanh %232 : vector<8x32xf32>
    %234 = arith.mulf %229, %233 : vector<8x32xf32>
    %c1_i32_80 = arith.constant 1 : i32
    %235 = arith.index_cast %c1_i32_80 : i32 to index
    %c0_81 = arith.constant 0 : index
    %c0_82 = arith.constant 0 : index
    %236 = vector.load %arg11[%235, %c0_81, %c0_82] : memref<8x8x128xf32, #tpu.memory_space<vmem>>, vector<1x8x128xf32>
    %237 = vector.shape_cast %236 : vector<1x8x128xf32> to vector<8x128xf32>
    %cst_83 = arith.constant dense<0.000000e+00> : vector<8x128xf32>
    %238 = tpu.matmul %234, %212, %cst_83 {dimension_numbers = #tpu.dot_dimension_numbers<[1], [0], [0], [1], [0, 0, 1, 1], [], []>} : vector<8x32xf32>, vector<32x128xf32>, vector<8x128xf32> -> vector<8x128xf32>
    %239 = arith.addf %237, %238 : vector<8x128xf32>
    %240 = arith.negf %239 : vector<8x128xf32>
    %241 = math.exp %240 : vector<8x128xf32>
    %cst_84 = arith.constant 1.000000e+00 : f32
    %242 = vector.broadcast %cst_84 : f32 to vector<8x128xf32>
    %243 = arith.addf %242, %241 : vector<8x128xf32>
    %244 = arith.divf %242, %243 : vector<8x128xf32>
    %245 = math.tanh %239 : vector<8x128xf32>
    %246 = vector.extract_strided_slice %244 {offsets = [0, 0], sizes = [8, 32], strides = [1, 1]} : vector<8x128xf32> to vector<8x32xf32>
    %247 = vector.extract_strided_slice %244 {offsets = [0, 32], sizes = [8, 32], strides = [1, 1]} : vector<8x128xf32> to vector<8x32xf32>
    %248 = vector.extract_strided_slice %245 {offsets = [0, 64], sizes = [8, 32], strides = [1, 1]} : vector<8x128xf32> to vector<8x32xf32>
    %249 = vector.extract_strided_slice %244 {offsets = [0, 96], sizes = [8, 32], strides = [1, 1]} : vector<8x128xf32> to vector<8x32xf32>
    %250 = arith.mulf %247, %232 : vector<8x32xf32>
    %251 = arith.mulf %246, %248 : vector<8x32xf32>
    %252 = arith.addf %250, %251 : vector<8x32xf32>
    %253 = math.tanh %252 : vector<8x32xf32>
    %254 = arith.mulf %249, %253 : vector<8x32xf32>
    %c2_i32_85 = arith.constant 2 : i32
    %255 = arith.index_cast %c2_i32_85 : i32 to index
    %c0_86 = arith.constant 0 : index
    %c0_87 = arith.constant 0 : index
    %256 = vector.load %arg11[%255, %c0_86, %c0_87] : memref<8x8x128xf32, #tpu.memory_space<vmem>>, vector<1x8x128xf32>
    %257 = vector.shape_cast %256 : vector<1x8x128xf32> to vector<8x128xf32>
    %cst_88 = arith.constant dense<0.000000e+00> : vector<8x128xf32>
    %258 = tpu.matmul %254, %212, %cst_88 {dimension_numbers = #tpu.dot_dimension_numbers<[1], [0], [0], [1], [0, 0, 1, 1], [], []>} : vector<8x32xf32>, vector<32x128xf32>, vector<8x128xf32> -> vector<8x128xf32>
    %259 = arith.addf %257, %258 : vector<8x128xf32>
    %260 = arith.negf %259 : vector<8x128xf32>
    %261 = math.exp %260 : vector<8x128xf32>
    %cst_89 = arith.constant 1.000000e+00 : f32
    %262 = vector.broadcast %cst_89 : f32 to vector<8x128xf32>
    %263 = arith.addf %262, %261 : vector<8x128xf32>
    %264 = arith.divf %262, %263 : vector<8x128xf32>
    %265 = math.tanh %259 : vector<8x128xf32>
    %266 = vector.extract_strided_slice %264 {offsets = [0, 0], sizes = [8, 32], strides = [1, 1]} : vector<8x128xf32> to vector<8x32xf32>
    %267 = vector.extract_strided_slice %264 {offsets = [0, 32], sizes = [8, 32], strides = [1, 1]} : vector<8x128xf32> to vector<8x32xf32>
    %268 = vector.extract_strided_slice %265 {offsets = [0, 64], sizes = [8, 32], strides = [1, 1]} : vector<8x128xf32> to vector<8x32xf32>
    %269 = vector.extract_strided_slice %264 {offsets = [0, 96], sizes = [8, 32], strides = [1, 1]} : vector<8x128xf32> to vector<8x32xf32>
    %270 = arith.mulf %267, %252 : vector<8x32xf32>
    %271 = arith.mulf %266, %268 : vector<8x32xf32>
    %272 = arith.addf %270, %271 : vector<8x32xf32>
    %273 = math.tanh %272 : vector<8x32xf32>
    %274 = arith.mulf %269, %273 : vector<8x32xf32>
    %c3_i32_90 = arith.constant 3 : i32
    %275 = arith.index_cast %c3_i32_90 : i32 to index
    %c0_91 = arith.constant 0 : index
    %c0_92 = arith.constant 0 : index
    %276 = vector.load %arg11[%275, %c0_91, %c0_92] : memref<8x8x128xf32, #tpu.memory_space<vmem>>, vector<1x8x128xf32>
    %277 = vector.shape_cast %276 : vector<1x8x128xf32> to vector<8x128xf32>
    %cst_93 = arith.constant dense<0.000000e+00> : vector<8x128xf32>
    %278 = tpu.matmul %274, %212, %cst_93 {dimension_numbers = #tpu.dot_dimension_numbers<[1], [0], [0], [1], [0, 0, 1, 1], [], []>} : vector<8x32xf32>, vector<32x128xf32>, vector<8x128xf32> -> vector<8x128xf32>
    %279 = arith.addf %277, %278 : vector<8x128xf32>
    %280 = arith.negf %279 : vector<8x128xf32>
    %281 = math.exp %280 : vector<8x128xf32>
    %cst_94 = arith.constant 1.000000e+00 : f32
    %282 = vector.broadcast %cst_94 : f32 to vector<8x128xf32>
    %283 = arith.addf %282, %281 : vector<8x128xf32>
    %284 = arith.divf %282, %283 : vector<8x128xf32>
    %285 = math.tanh %279 : vector<8x128xf32>
    %286 = vector.extract_strided_slice %284 {offsets = [0, 0], sizes = [8, 32], strides = [1, 1]} : vector<8x128xf32> to vector<8x32xf32>
    %287 = vector.extract_strided_slice %284 {offsets = [0, 32], sizes = [8, 32], strides = [1, 1]} : vector<8x128xf32> to vector<8x32xf32>
    %288 = vector.extract_strided_slice %285 {offsets = [0, 64], sizes = [8, 32], strides = [1, 1]} : vector<8x128xf32> to vector<8x32xf32>
    %289 = vector.extract_strided_slice %284 {offsets = [0, 96], sizes = [8, 32], strides = [1, 1]} : vector<8x128xf32> to vector<8x32xf32>
    %290 = arith.mulf %287, %272 : vector<8x32xf32>
    %291 = arith.mulf %286, %288 : vector<8x32xf32>
    %292 = arith.addf %290, %291 : vector<8x32xf32>
    %293 = math.tanh %292 : vector<8x32xf32>
    %294 = arith.mulf %289, %293 : vector<8x32xf32>
    %c4_i32_95 = arith.constant 4 : i32
    %295 = arith.index_cast %c4_i32_95 : i32 to index
    %c0_96 = arith.constant 0 : index
    %c0_97 = arith.constant 0 : index
    %296 = vector.load %arg11[%295, %c0_96, %c0_97] : memref<8x8x128xf32, #tpu.memory_space<vmem>>, vector<1x8x128xf32>
    %297 = vector.shape_cast %296 : vector<1x8x128xf32> to vector<8x128xf32>
    %cst_98 = arith.constant dense<0.000000e+00> : vector<8x128xf32>
    %298 = tpu.matmul %294, %212, %cst_98 {dimension_numbers = #tpu.dot_dimension_numbers<[1], [0], [0], [1], [0, 0, 1, 1], [], []>} : vector<8x32xf32>, vector<32x128xf32>, vector<8x128xf32> -> vector<8x128xf32>
    %299 = arith.addf %297, %298 : vector<8x128xf32>
    %300 = arith.negf %299 : vector<8x128xf32>
    %301 = math.exp %300 : vector<8x128xf32>
    %cst_99 = arith.constant 1.000000e+00 : f32
    %302 = vector.broadcast %cst_99 : f32 to vector<8x128xf32>
    %303 = arith.addf %302, %301 : vector<8x128xf32>
    %304 = arith.divf %302, %303 : vector<8x128xf32>
    %305 = math.tanh %299 : vector<8x128xf32>
    %306 = vector.extract_strided_slice %304 {offsets = [0, 0], sizes = [8, 32], strides = [1, 1]} : vector<8x128xf32> to vector<8x32xf32>
    %307 = vector.extract_strided_slice %304 {offsets = [0, 32], sizes = [8, 32], strides = [1, 1]} : vector<8x128xf32> to vector<8x32xf32>
    %308 = vector.extract_strided_slice %305 {offsets = [0, 64], sizes = [8, 32], strides = [1, 1]} : vector<8x128xf32> to vector<8x32xf32>
    %309 = vector.extract_strided_slice %304 {offsets = [0, 96], sizes = [8, 32], strides = [1, 1]} : vector<8x128xf32> to vector<8x32xf32>
    %310 = arith.mulf %307, %292 : vector<8x32xf32>
    %311 = arith.mulf %306, %308 : vector<8x32xf32>
    %312 = arith.addf %310, %311 : vector<8x32xf32>
    %313 = math.tanh %312 : vector<8x32xf32>
    %314 = arith.mulf %309, %313 : vector<8x32xf32>
    %c5_i32_100 = arith.constant 5 : i32
    %315 = arith.index_cast %c5_i32_100 : i32 to index
    %c0_101 = arith.constant 0 : index
    %c0_102 = arith.constant 0 : index
    %316 = vector.load %arg11[%315, %c0_101, %c0_102] : memref<8x8x128xf32, #tpu.memory_space<vmem>>, vector<1x8x128xf32>
    %317 = vector.shape_cast %316 : vector<1x8x128xf32> to vector<8x128xf32>
    %cst_103 = arith.constant dense<0.000000e+00> : vector<8x128xf32>
    %318 = tpu.matmul %314, %212, %cst_103 {dimension_numbers = #tpu.dot_dimension_numbers<[1], [0], [0], [1], [0, 0, 1, 1], [], []>} : vector<8x32xf32>, vector<32x128xf32>, vector<8x128xf32> -> vector<8x128xf32>
    %319 = arith.addf %317, %318 : vector<8x128xf32>
    %320 = arith.negf %319 : vector<8x128xf32>
    %321 = math.exp %320 : vector<8x128xf32>
    %cst_104 = arith.constant 1.000000e+00 : f32
    %322 = vector.broadcast %cst_104 : f32 to vector<8x128xf32>
    %323 = arith.addf %322, %321 : vector<8x128xf32>
    %324 = arith.divf %322, %323 : vector<8x128xf32>
    %325 = math.tanh %319 : vector<8x128xf32>
    %326 = vector.extract_strided_slice %324 {offsets = [0, 0], sizes = [8, 32], strides = [1, 1]} : vector<8x128xf32> to vector<8x32xf32>
    %327 = vector.extract_strided_slice %324 {offsets = [0, 32], sizes = [8, 32], strides = [1, 1]} : vector<8x128xf32> to vector<8x32xf32>
    %328 = vector.extract_strided_slice %325 {offsets = [0, 64], sizes = [8, 32], strides = [1, 1]} : vector<8x128xf32> to vector<8x32xf32>
    %329 = vector.extract_strided_slice %324 {offsets = [0, 96], sizes = [8, 32], strides = [1, 1]} : vector<8x128xf32> to vector<8x32xf32>
    %330 = arith.mulf %327, %312 : vector<8x32xf32>
    %331 = arith.mulf %326, %328 : vector<8x32xf32>
    %332 = arith.addf %330, %331 : vector<8x32xf32>
    %333 = math.tanh %332 : vector<8x32xf32>
    %334 = arith.mulf %329, %333 : vector<8x32xf32>
    %c6_i32_105 = arith.constant 6 : i32
    %335 = arith.index_cast %c6_i32_105 : i32 to index
    %c0_106 = arith.constant 0 : index
    %c0_107 = arith.constant 0 : index
    %336 = vector.load %arg11[%335, %c0_106, %c0_107] : memref<8x8x128xf32, #tpu.memory_space<vmem>>, vector<1x8x128xf32>
    %337 = vector.shape_cast %336 : vector<1x8x128xf32> to vector<8x128xf32>
    %cst_108 = arith.constant dense<0.000000e+00> : vector<8x128xf32>
    %338 = tpu.matmul %334, %212, %cst_108 {dimension_numbers = #tpu.dot_dimension_numbers<[1], [0], [0], [1], [0, 0, 1, 1], [], []>} : vector<8x32xf32>, vector<32x128xf32>, vector<8x128xf32> -> vector<8x128xf32>
    %339 = arith.addf %337, %338 : vector<8x128xf32>
    %340 = arith.negf %339 : vector<8x128xf32>
    %341 = math.exp %340 : vector<8x128xf32>
    %cst_109 = arith.constant 1.000000e+00 : f32
    %342 = vector.broadcast %cst_109 : f32 to vector<8x128xf32>
    %343 = arith.addf %342, %341 : vector<8x128xf32>
    %344 = arith.divf %342, %343 : vector<8x128xf32>
    %345 = math.tanh %339 : vector<8x128xf32>
    %346 = vector.extract_strided_slice %344 {offsets = [0, 0], sizes = [8, 32], strides = [1, 1]} : vector<8x128xf32> to vector<8x32xf32>
    %347 = vector.extract_strided_slice %344 {offsets = [0, 32], sizes = [8, 32], strides = [1, 1]} : vector<8x128xf32> to vector<8x32xf32>
    %348 = vector.extract_strided_slice %345 {offsets = [0, 64], sizes = [8, 32], strides = [1, 1]} : vector<8x128xf32> to vector<8x32xf32>
    %349 = vector.extract_strided_slice %344 {offsets = [0, 96], sizes = [8, 32], strides = [1, 1]} : vector<8x128xf32> to vector<8x32xf32>
    %350 = arith.mulf %347, %332 : vector<8x32xf32>
    %351 = arith.mulf %346, %348 : vector<8x32xf32>
    %352 = arith.addf %350, %351 : vector<8x32xf32>
    %353 = math.tanh %352 : vector<8x32xf32>
    %354 = arith.mulf %349, %353 : vector<8x32xf32>
    %c7_i32_110 = arith.constant 7 : i32
    %355 = arith.index_cast %c7_i32_110 : i32 to index
    %c0_111 = arith.constant 0 : index
    %c0_112 = arith.constant 0 : index
    %356 = vector.load %arg11[%355, %c0_111, %c0_112] : memref<8x8x128xf32, #tpu.memory_space<vmem>>, vector<1x8x128xf32>
    %357 = vector.shape_cast %356 : vector<1x8x128xf32> to vector<8x128xf32>
    %cst_113 = arith.constant dense<0.000000e+00> : vector<8x128xf32>
    %358 = tpu.matmul %354, %212, %cst_113 {dimension_numbers = #tpu.dot_dimension_numbers<[1], [0], [0], [1], [0, 0, 1, 1], [], []>} : vector<8x32xf32>, vector<32x128xf32>, vector<8x128xf32> -> vector<8x128xf32>
    %359 = arith.addf %357, %358 : vector<8x128xf32>
    %360 = arith.negf %359 : vector<8x128xf32>
    %361 = math.exp %360 : vector<8x128xf32>
    %cst_114 = arith.constant 1.000000e+00 : f32
    %362 = vector.broadcast %cst_114 : f32 to vector<8x128xf32>
    %363 = arith.addf %362, %361 : vector<8x128xf32>
    %364 = arith.divf %362, %363 : vector<8x128xf32>
    %365 = math.tanh %359 : vector<8x128xf32>
    %366 = vector.extract_strided_slice %364 {offsets = [0, 0], sizes = [8, 32], strides = [1, 1]} : vector<8x128xf32> to vector<8x32xf32>
    %367 = vector.extract_strided_slice %364 {offsets = [0, 32], sizes = [8, 32], strides = [1, 1]} : vector<8x128xf32> to vector<8x32xf32>
    %368 = vector.extract_strided_slice %365 {offsets = [0, 64], sizes = [8, 32], strides = [1, 1]} : vector<8x128xf32> to vector<8x32xf32>
    %369 = vector.extract_strided_slice %364 {offsets = [0, 96], sizes = [8, 32], strides = [1, 1]} : vector<8x128xf32> to vector<8x32xf32>
    %370 = arith.mulf %367, %352 : vector<8x32xf32>
    %371 = arith.mulf %366, %368 : vector<8x32xf32>
    %372 = arith.addf %370, %371 : vector<8x32xf32>
    %373 = math.tanh %372 : vector<8x32xf32>
    %374 = arith.mulf %369, %373 : vector<8x32xf32>
    %c8_i32_115 = arith.constant 8 : i32
    %c0_116 = arith.constant 0 : index
    %c0_117 = arith.constant 0 : index
    %375 = vector.load %arg8[%c0_116, %c0_117] : memref<1x4xf32, #tpu.memory_space<vmem>>, vector<1x4xf32>
    %c0_118 = arith.constant 0 : index
    %c0_119 = arith.constant 0 : index
    %376 = vector.load %arg7[%c0_118, %c0_119] : memref<64x4xf32, #tpu.memory_space<vmem>>, vector<32x4xf32>
    %cst_120 = arith.constant dense<0.000000e+00> : vector<8x4xf32>
    %377 = tpu.matmul %198, %376, %cst_120 {dimension_numbers = #tpu.dot_dimension_numbers<[1], [0], [0], [1], [0, 0, 1, 1], [], []>} : vector<8x32xf32>, vector<32x4xf32>, vector<8x4xf32> -> vector<8x4xf32>
    %378 = vector.broadcast %375 : vector<1x4xf32> to vector<8x4xf32>
    %379 = arith.addf %378, %377 : vector<8x4xf32>
    %c32 = arith.constant 32 : index
    %c0_121 = arith.constant 0 : index
    %380 = vector.load %arg7[%c32, %c0_121] : memref<64x4xf32, #tpu.memory_space<vmem>>, vector<32x4xf32>
    %cst_122 = arith.constant dense<0.000000e+00> : vector<8x4xf32>
    %381 = tpu.matmul %374, %380, %cst_122 {dimension_numbers = #tpu.dot_dimension_numbers<[1], [0], [0], [1], [0, 0, 1, 1], [], []>} : vector<8x32xf32>, vector<32x4xf32>, vector<8x4xf32> -> vector<8x4xf32>
    %382 = arith.addf %379, %381 : vector<8x4xf32>
    %cst_123 = arith.constant dense<0.000000e+00> : vector<8xf32>
    %383 = vector.multi_reduction <add>, %382, %cst_123 [1] : vector<8x4xf32> to vector<8xf32>
    %384 = vector.shape_cast %383 : vector<8xf32> to vector<8x1xf32>
    %cst_124 = arith.constant 4.000000e+00 : f32
    %385 = vector.broadcast %cst_124 : f32 to vector<8x1xf32>
    %386 = arith.divf %384, %385 : vector<8x1xf32>
    %387 = vector.broadcast %386 : vector<8x1xf32> to vector<8x4xf32>
    %388 = arith.subf %382, %387 : vector<8x4xf32>
    %389 = arith.mulf %388, %388 : vector<8x4xf32>
    %cst_125 = arith.constant dense<0.000000e+00> : vector<8xf32>
    %390 = vector.multi_reduction <add>, %389, %cst_125 [1] : vector<8x4xf32> to vector<8xf32>
    %391 = vector.shape_cast %390 : vector<8xf32> to vector<8x1xf32>
    %cst_126 = arith.constant 4.000000e+00 : f32
    %392 = vector.broadcast %cst_126 : f32 to vector<8x1xf32>
    %393 = arith.divf %391, %392 : vector<8x1xf32>
    %394 = vector.broadcast %386 : vector<8x1xf32> to vector<8x4xf32>
    %395 = arith.subf %382, %394 : vector<8x4xf32>
    %cst_127 = arith.constant 9.99999974E-6 : f32
    %396 = vector.broadcast %cst_127 : f32 to vector<8x1xf32>
    %397 = arith.addf %393, %396 : vector<8x1xf32>
    %398 = math.rsqrt %397 : vector<8x1xf32>
    %399 = vector.broadcast %398 : vector<8x1xf32> to vector<8x4xf32>
    %400 = arith.mulf %395, %399 : vector<8x4xf32>
    %cst_128 = arith.constant dense<0xFF800000> : vector<8xf32>
    %401 = vector.multi_reduction <maximumf>, %400, %cst_128 [1] : vector<8x4xf32> to vector<8xf32>
    %402 = vector.shape_cast %401 : vector<8xf32> to vector<8x1xf32>
    %403 = vector.broadcast %402 : vector<8x1xf32> to vector<8x4xf32>
    %404 = arith.subf %400, %403 : vector<8x4xf32>
    %405 = math.exp %404 : vector<8x4xf32>
    %cst_129 = arith.constant dense<0.000000e+00> : vector<8xf32>
    %406 = vector.multi_reduction <add>, %405, %cst_129 [1] : vector<8x4xf32> to vector<8xf32>
    %407 = vector.shape_cast %406 : vector<8xf32> to vector<8x1xf32>
    %408 = math.log %407 : vector<8x1xf32>
    %409 = vector.broadcast %408 : vector<8x1xf32> to vector<8x4xf32>
    %410 = arith.subf %404, %409 : vector<8x4xf32>
    %c0_130 = arith.constant 0 : index
    %c0_131 = arith.constant 0 : index
    %411 = vector.load %arg9[%c0_130, %c0_131] : memref<8x4xf32, #tpu.memory_space<vmem>>, vector<8x4xf32>
    tpu.vector_store %arg9[%c0_130, %c0_131], %410 {strides = array<i32>} : memref<8x4xf32, #tpu.memory_space<vmem>>, vector<8x4xf32>,
    return
  }
}

</mosaic_0001>

<llo_original>
// kernel: text_sirnn_forward.1
$region0: #{text_sirnn_forward.1}
  #allocation0 [shape = 'u32[]', space=smem, size = 0x4, offset = 0x4, fixed_abs, tag = 'smem constant byte address 0x4 - core index']
  #allocation1 [shape = 'u32[72,128]{1,0:T(1,128)}', space=vmem, size = 0x9000, scoped, tag = 'internal scratch']
  #allocation2 [shape = 'f32[8,8,32]{2,1,0:T(8,128)}', space=vmem, size = 0x8000, scoped, tag = 'scratch operand']
  #allocation3 [shape = 'f32[8,8,128]{2,1,0:T(8,128)}', space=vmem, size = 0x8000, scoped, tag = 'scratch operand']
  %s0 = inlined_call_operand.vmem [shape: f32[64,32], index: 0, kind: input, shape index: {}]
  %s1 = inlined_call_operand.vmem [shape: f32[32,128], index: 1, kind: input, shape index: {}]
  %s2 = inlined_call_operand.vmem [shape: f32[32,128], index: 2, kind: input, shape index: {}]
  %s3 = inlined_call_operand.vmem [shape: f32[32,128], index: 3, kind: input, shape index: {}]
  %s4 = inlined_call_operand.vmem [shape: f32[32,128], index: 4, kind: input, shape index: {}]
  %s5 = inlined_call_operand.vmem [shape: f32[1,128], index: 5, kind: input, shape index: {}]
  %s6 = inlined_call_operand.vmem [shape: f32[1,128], index: 6, kind: input, shape index: {}]
  %s7 = inlined_call_operand.vmem [shape: f32[64,4], index: 7, kind: input, shape index: {}]
  %s8 = inlined_call_operand.vmem [shape: f32[1,4], index: 8, kind: input, shape index: {}]
  %s9 = inlined_call_operand.vmem [shape: f32[8,4], index: 9, kind: output, shape index: {}]
  %s10 = sld [smem:[#allocation0]]
  $region46: #{text_sirnn_forward.1} parent=0
    _
  %s12 = ssub.s32 1, %s10
  %s13 = scalar_select 0, %s12, %s10
  // Predicated region
  $region2: #{text_sirnn_forward.1} parent=0 // pred_check
    _
  $region3: #{text_sirnn_forward.1} parent=0 // pred_check_branch
    %15 = sbr.rel (0) target = $region5
  $region4: #{text_sirnn_forward.1} parent=0 // pred_region
    _
  $region5: #{text_sirnn_forward.1} parent=0 // pred_fallthru
    _
  // Predicated region
  $region6: #{text_sirnn_forward.1} parent=0 // pred_check
    _
  $region7: #{text_sirnn_forward.1} parent=0 // pred_check_branch
    %17 = sbr.rel (0) target = $region9
  $region8: #{text_sirnn_forward.1} parent=0 // pred_region
    _
  $region9: #{text_sirnn_forward.1} parent=0 // pred_fallthru
    _
  // Predicated region
  $region10: #{text_sirnn_forward.1} parent=0 // pred_check
    _
  $region11: #{text_sirnn_forward.1} parent=0 // pred_check_branch
    %19 = sbr.rel (0) target = $region13
  $region12: #{text_sirnn_forward.1} parent=0 // pred_region
    _
  $region13: #{text_sirnn_forward.1} parent=0 // pred_fallthru
    _
  // Predicated region
  $region14: #{text_sirnn_forward.1} parent=0 // pred_check
    _
  $region15: #{text_sirnn_forward.1} parent=0 // pred_check_branch
    %21 = sbr.rel (0) target = $region17
  $region16: #{text_sirnn_forward.1} parent=0 // pred_region
    _
  $region17: #{text_sirnn_forward.1} parent=0 // pred_fallthru
    _
  // Predicated region
  $region18: #{text_sirnn_forward.1} parent=0 // pred_check
    _
  $region19: #{text_sirnn_forward.1} parent=0 // pred_check_branch
    %23 = sbr.rel (0) target = $region21
  $region20: #{text_sirnn_forward.1} parent=0 // pred_region
    _
  $region21: #{text_sirnn_forward.1} parent=0 // pred_fallthru
    _
  // Predicated region
  $region22: #{text_sirnn_forward.1} parent=0 // pred_check
    _
  $region23: #{text_sirnn_forward.1} parent=0 // pred_check_branch
    %25 = sbr.rel (0) target = $region25
  $region24: #{text_sirnn_forward.1} parent=0 // pred_region
    _
  $region25: #{text_sirnn_forward.1} parent=0 // pred_fallthru
    _
  // Predicated region
  $region26: #{text_sirnn_forward.1} parent=0 // pred_check
    _
  $region27: #{text_sirnn_forward.1} parent=0 // pred_check_branch
    %27 = sbr.rel (0) target = $region29
  $region28: #{text_sirnn_forward.1} parent=0 // pred_region
    _
  $region29: #{text_sirnn_forward.1} parent=0 // pred_fallthru
    _
  // Predicated region
  $region30: #{text_sirnn_forward.1} parent=0 // pred_check
    _
  $region31: #{text_sirnn_forward.1} parent=0 // pred_check_branch
    %29 = sbr.rel (0) target = $region33
  $region32: #{text_sirnn_forward.1} parent=0 // pred_region
    _
  $region33: #{text_sirnn_forward.1} parent=0 // pred_fallthru
    _
  // Predicated region
  $region34: #{text_sirnn_forward.1} parent=0 // pred_check
    _
  $region35: #{text_sirnn_forward.1} parent=0 // pred_check_branch
    %31 = sbr.rel (0) target = $region37
  $region36: #{text_sirnn_forward.1} parent=0 // pred_region
    _
  $region37: #{text_sirnn_forward.1} parent=0 // pred_fallthru
    _
  %v32 = vld [vmem:[%s0] sm:$0xff]
  %v33 = vld [vmem:[%s0 + $0x8] sm:$0xff]
  %v34 = vld [vmem:[%s0 + $0x10] sm:$0xff]
  %v35 = vld [vmem:[%s0 + $0x18] sm:$0xff]
  %v36 = vld [vmem:[%s0 + $0x20] sm:$0xff]
  %v37 = vld [vmem:[%s0 + $0x28] sm:$0xff]
  %v38 = vld [vmem:[%s0 + $0x30] sm:$0xff]
  %v39 = vld [vmem:[%s0 + $0x38] sm:$0xff]
  %v40 = vld [vmem:[%s1] sm:$0xff]
  %v41 = vld [vmem:[%s1 + $0x8] sm:$0xff]
  %v42 = vld [vmem:[%s1 + $0x10] sm:$0xff]
  %v43 = vld [vmem:[%s1 + $0x18] sm:$0xff]
  %v44 = vld [vmem:[%s5] sm:$0x1]
  %v46 = vperm.slane %v44, 0
  %vm48 = vcmask 261120
  %v50 = vsel %vm48, %v32, 0
  %v53 = vsel %vm48, %v33, 0
  %v56 = vsel %vm48, %v34, 0
  %v59 = vsel %vm48, %v35, 0
  %v62 = vsel %vm48, %v36, 0
  %v65 = vsel %vm48, %v37, 0
  %v68 = vsel %vm48, %v38, 0
  %v71 = vsel %vm48, %v39, 0
  %73 = vmatpush.msra.mxu0 0.0
  %74 = vmatpush.msra.mxu0 0.0
  %75 = vmatpush.msra.mxu0 0.0
  %76 = vmatpush.msra.mxu0 0.0
  %77 = vmatpush.msra.mxu0 0.0
  %78 = vmatpush.msra.mxu0 0.0
  %79 = vmatpush.msra.mxu0 0.0
  %80 = vmatpush.msra.mxu0 0.0
  %81 = vmatpush.msra.mxu0 0.0
  %82 = vmatpush.msra.mxu0 0.0
  %83 = vmatpush.msra.mxu0 0.0
  %84 = vmatpush.msra.mxu0 0.0
  %85 = vmatpush.msra.mxu0 %v43
  %86 = vmatpush.msra.mxu0 %v42
  %87 = vmatpush.msra.mxu0 %v41
  %88 = vmatpush.msra.mxu0 %v40
  %89 = vmatmul.f32.gmra.mxu0 %v50
  %v90 = vpop.f32.mrf.mxu0
  %v91 = vadd.f32 %v46, %v90
  %92 = vmatmul.f32.gmra.mxu0 %v53
  %v93 = vpop.f32.mrf.mxu0
  %v94 = vadd.f32 %v46, %v93
  %95 = vmatmul.f32.gmra.mxu0 %v56
  %v96 = vpop.f32.mrf.mxu0
  %v97 = vadd.f32 %v46, %v96
  %98 = vmatmul.f32.gmra.mxu0 %v59
  %v99 = vpop.f32.mrf.mxu0
  %v100 = vadd.f32 %v46, %v99
  %101 = vmatmul.f32.gmra.mxu0 %v62
  %v102 = vpop.f32.mrf.mxu0
  %v103 = vadd.f32 %v46, %v102
  %104 = vmatmul.f32.gmra.mxu0 %v65
  %v105 = vpop.f32.mrf.mxu0
  %v106 = vadd.f32 %v46, %v105
  %107 = vmatmul.f32.gmra.mxu0 %v68
  %v108 = vpop.f32.mrf.mxu0
  %v109 = vadd.f32 %v46, %v108
  %110 = vmatmul.f32.gmra.mxu0 %v71
  %v111 = vpop.f32.mrf.mxu0
  %v112 = vadd.f32 %v46, %v111
  %113 = vdwg.mxu0
  %114 = vst [vmem:[#allocation3] sm:$0xff] %v91
  %115 = vst [vmem:[#allocation3 + $0x8] sm:$0xff] %v94
  %116 = vst [vmem:[#allocation3 + $0x10] sm:$0xff] %v97
  %117 = vst [vmem:[#allocation3 + $0x18] sm:$0xff] %v100
  %118 = vst [vmem:[#allocation3 + $0x20] sm:$0xff] %v103
  %119 = vst [vmem:[#allocation3 + $0x28] sm:$0xff] %v106
  %120 = vst [vmem:[#allocation3 + $0x30] sm:$0xff] %v109
  %121 = vst [vmem:[#allocation3 + $0x38] sm:$0xff] %v112
  %v122 = vld [vmem:[%s3] sm:$0xff]
  %v123 = vld [vmem:[%s3 + $0x8] sm:$0xff]
  %v124 = vld [vmem:[%s3 + $0x10] sm:$0xff]
  %v125 = vld [vmem:[%s3 + $0x18] sm:$0xff]
  %v126 = vld [vmem:[#allocation3] sm:$0xff]
  %v128 = vsel %vm48, 0.0, 0
  %130 = vmatpush.msra.mxu0 0.0
  %131 = vmatpush.msra.mxu0 0.0
  %132 = vmatpush.msra.mxu0 0.0
  %133 = vmatpush.msra.mxu0 0.0
  %134 = vmatpush.msra.mxu0 0.0
  %135 = vmatpush.msra.mxu0 0.0
  %136 = vmatpush.msra.mxu0 0.0
  %137 = vmatpush.msra.mxu0 0.0
  %138 = vmatpush.msra.mxu0 0.0
  %139 = vmatpush.msra.mxu0 0.0
  %140 = vmatpush.msra.mxu0 0.0
  %141 = vmatpush.msra.mxu0 0.0
  %142 = vmatpush.msra.mxu0 %v125
  %143 = vmatpush.msra.mxu0 %v124
  %144 = vmatpush.msra.mxu0 %v123
  %145 = vmatpush.msra.mxu0 %v122
  %146 = vmatmul.f32.gmra.mxu0 %v128
  %v147 = vpop.f32.mrf.mxu0
  %v148 = vadd.f32 0.0, %v147
  %149 = vdwg.mxu0
  %v150 = vadd.f32 %v126, %v148
  %v151 = vxor.u32 %v150, 2147483648
  %v152 = vmul.f32 %v151, 1.442695
  %v153 = vpow.pop %v152
  %v154 = vadd.f32 %v153, 1.0
  %v155 = vrcp.pop %v154
  %v156 = vmul.f32 %v154, %v155
  %v157 = vsub.f32 1.0, %v156
  %v158 = vmul.f32 %v155, %v157
  %v159 = vadd.f32 %v155, %v158
  %vm160 = vweird.f32 %v154
  %vm161 = vweird.f32 %v155
  %vm162 = vmor %vm160, %vm161
  %v163 = vsel %vm162, %v155, %v159
  %v164 = vand.u32 2147483647, %v154
  %vm165 = vcmp.eq.f32.partialorder %v164, 8.507059e+37
  %v166 = vand.u32 %v154, 2147483648
  %v167 = vor.u32 1.1754944e-38, %v166
  %v168 = vsel %vm165, %v167, %v163
  %v169 = vmul.f32 1.0, %v168
  %v170 = vtanh.pop %v150
  %v171 = vmul.f32 %v169, 0.0
  %173 = vrot.lane.b32.xlu0 %v170, 64
  %v174 = vpop.permute.xlu0 %173
  %v176 = vmul.f32 %v169, %v174
  %178 = vrot.lane.b32.xlu0 %v176, 32
  %v179 = vpop.permute.xlu0 %178
  %v181 = vadd.f32 %v171, %v179
  %v182 = vtanh.pop %v181
  %184 = vrot.lane.b32.xlu0 %v182, 64
  %v185 = vpop.permute.xlu0 %184
  %v187 = vmul.f32 %v169, %v185
  %189 = vrot.lane.b32.xlu0 %v187, 32
  %v190 = vpop.permute.xlu0 %189
  %192 = vst.msk [vmem:[#allocation2] sm:$0xff] %vm48, %v190
  %s193 = scalar_lea.vmem [#allocation3], 8
  %v194 = vld [vmem:[%s193] sm:$0xff]
  %v195 = vsel %vm48, %v190, 0
  %197 = vmatpush.msra.mxu0 0.0
  %198 = vmatpush.msra.mxu0 0.0
  %199 = vmatpush.msra.mxu0 0.0
  %200 = vmatpush.msra.mxu0 0.0
  %201 = vmatpush.msra.mxu0 0.0
  %202 = vmatpush.msra.mxu0 0.0
  %203 = vmatpush.msra.mxu0 0.0
  %204 = vmatpush.msra.mxu0 0.0
  %205 = vmatpush.msra.mxu0 0.0
  %206 = vmatpush.msra.mxu0 0.0
  %207 = vmatpush.msra.mxu0 0.0
  %208 = vmatpush.msra.mxu0 0.0
  %209 = vmatpush.msra.mxu0 %v125
  %210 = vmatpush.msra.mxu0 %v124
  %211 = vmatpush.msra.mxu0 %v123
  %212 = vmatpush.msra.mxu0 %v122
  %213 = vmatmul.f32.gmra.mxu0 %v195
  %v214 = vpop.f32.mrf.mxu0
  %v215 = vadd.f32 0.0, %v214
  %216 = vdwg.mxu0
  %v217 = vadd.f32 %v194, %v215
  %v218 = vxor.u32 %v217, 2147483648
  %v219 = vmul.f32 %v218, 1.442695
  %v220 = vpow.pop %v219
  %v221 = vadd.f32 %v220, 1.0
  %v222 = vrcp.pop %v221
  %v223 = vmul.f32 %v221, %v222
  %v224 = vsub.f32 1.0, %v223
  %v225 = vmul.f32 %v222, %v224
  %v226 = vadd.f32 %v222, %v225
  %vm227 = vweird.f32 %v221
  %vm228 = vweird.f32 %v222
  %vm229 = vmor %vm227, %vm228
  %v230 = vsel %vm229, %v222, %v226
  %v231 = vand.u32 2147483647, %v221
  %vm232 = vcmp.eq.f32.partialorder %v231, 8.507059e+37
  %v233 = vand.u32 %v221, 2147483648
  %v234 = vor.u32 1.1754944e-38, %v233
  %v235 = vsel %vm232, %v234, %v230
  %v236 = vmul.f32 1.0, %v235
  %v237 = vtanh.pop %v217
  %v238 = vmul.f32 %v236, %v181
  %240 = vrot.lane.b32.xlu0 %v237, 64
  %v241 = vpop.permute.xlu0 %240
  %v243 = vmul.f32 %v236, %v241
  %245 = vrot.lane.b32.xlu0 %v243, 32
  %v246 = vpop.permute.xlu0 %245
  %v248 = vadd.f32 %v238, %v246
  %v249 = vtanh.pop %v248
  %251 = vrot.lane.b32.xlu0 %v249, 64
  %v252 = vpop.permute.xlu0 %251
  %v254 = vmul.f32 %v236, %v252
  %256 = vrot.lane.b32.xlu0 %v254, 32
  %v257 = vpop.permute.xlu0 %256
  %s259 = scalar_lea.vmem [#allocation2], 8
  %260 = vst.msk [vmem:[%s259] sm:$0xff] %vm48, %v257
  %s261 = scalar_lea.vmem [#allocation3], 16
  %v262 = vld [vmem:[%s261] sm:$0xff]
  %v263 = vsel %vm48, %v257, 0
  %265 = vmatpush.msra.mxu0 0.0
  %266 = vmatpush.msra.mxu0 0.0
  %267 = vmatpush.msra.mxu0 0.0
  %268 = vmatpush.msra.mxu0 0.0
  %269 = vmatpush.msra.mxu0 0.0
  %270 = vmatpush.msra.mxu0 0.0
  %271 = vmatpush.msra.mxu0 0.0
  %272 = vmatpush.msra.mxu0 0.0
  %273 = vmatpush.msra.mxu0 0.0
  %274 = vmatpush.msra.mxu0 0.0
  %275 = vmatpush.msra.mxu0 0.0
  %276 = vmatpush.msra.mxu0 0.0
  %277 = vmatpush.msra.mxu0 %v125
  %278 = vmatpush.msra.mxu0 %v124
  %279 = vmatpush.msra.mxu0 %v123
  %280 = vmatpush.msra.mxu0 %v122
  %281 = vmatmul.f32.gmra.mxu0 %v263
  %v282 = vpop.f32.mrf.mxu0
  %v283 = vadd.f32 0.0, %v282
  %284 = vdwg.mxu0
  %v285 = vadd.f32 %v262, %v283
  %v286 = vxor.u32 %v285, 2147483648
  %v287 = vmul.f32 %v286, 1.442695
  %v288 = vpow.pop %v287
  %v289 = vadd.f32 %v288, 1.0
  %v290 = vrcp.pop %v289
  %v291 = vmul.f32 %v289, %v290
  %v292 = vsub.f32 1.0, %v291
  %v293 = vmul.f32 %v290, %v292
  %v294 = vadd.f32 %v290, %v293
  %vm295 = vweird.f32 %v289
  %vm296 = vweird.f32 %v290
  %vm297 = vmor %vm295, %vm296
  %v298 = vsel %vm297, %v290, %v294
  %v299 = vand.u32 2147483647, %v289
  %vm300 = vcmp.eq.f32.partialorder %v299, 8.507059e+37
  %v301 = vand.u32 %v289, 2147483648
  %v302 = vor.u32 1.1754944e-38, %v301
  %v303 = vsel %vm300, %v302, %v298
  %v304 = vmul.f32 1.0, %v303
  %v305 = vtanh.pop %v285
  %v306 = vmul.f32 %v304, %v248
  %308 = vrot.lane.b32.xlu0 %v305, 64
  %v309 = vpop.permute.xlu0 %308
  %v311 = vmul.f32 %v304, %v309
  %313 = vrot.lane.b32.xlu0 %v311, 32
  %v314 = vpop.permute.xlu0 %313
  %v316 = vadd.f32 %v306, %v314
  %v317 = vtanh.pop %v316
  %319 = vrot.lane.b32.xlu0 %v317, 64
  %v320 = vpop.permute.xlu0 %319
  %v322 = vmul.f32 %v304, %v320
  %324 = vrot.lane.b32.xlu0 %v322, 32
  %v325 = vpop.permute.xlu0 %324
  %s327 = scalar_lea.vmem [#allocation2], 16
  %328 = vst.msk [vmem:[%s327] sm:$0xff] %vm48, %v325
  %s329 = scalar_lea.vmem [#allocation3], 24
  %v330 = vld [vmem:[%s329] sm:$0xff]
  %v331 = vsel %vm48, %v325, 0
  %333 = vmatpush.msra.mxu0 0.0
  %334 = vmatpush.msra.mxu0 0.0
  %335 = vmatpush.msra.mxu0 0.0
  %336 = vmatpush.msra.mxu0 0.0
  %337 = vmatpush.msra.mxu0 0.0
  %338 = vmatpush.msra.mxu0 0.0
  %339 = vmatpush.msra.mxu0 0.0
  %340 = vmatpush.msra.mxu0 0.0
  %341 = vmatpush.msra.mxu0 0.0
  %342 = vmatpush.msra.mxu0 0.0
  %343 = vmatpush.msra.mxu0 0.0
  %344 = vmatpush.msra.mxu0 0.0
  %345 = vmatpush.msra.mxu0 %v125
  %346 = vmatpush.msra.mxu0 %v124
  %347 = vmatpush.msra.mxu0 %v123
  %348 = vmatpush.msra.mxu0 %v122
  %349 = vmatmul.f32.gmra.mxu0 %v331
  %v350 = vpop.f32.mrf.mxu0
  %v351 = vadd.f32 0.0, %v350
  %352 = vdwg.mxu0
  %v353 = vadd.f32 %v330, %v351
  %v354 = vxor.u32 %v353, 2147483648
  %v355 = vmul.f32 %v354, 1.442695
  %v356 = vpow.pop %v355
  %v357 = vadd.f32 %v356, 1.0
  %v358 = vrcp.pop %v357
  %v359 = vmul.f32 %v357, %v358
  %v360 = vsub.f32 1.0, %v359
  %v361 = vmul.f32 %v358, %v360
  %v362 = vadd.f32 %v358, %v361
  %vm363 = vweird.f32 %v357
  %vm364 = vweird.f32 %v358
  %vm365 = vmor %vm363, %vm364
  %v366 = vsel %vm365, %v358, %v362
  %v367 = vand.u32 2147483647, %v357
  %vm368 = vcmp.eq.f32.partialorder %v367, 8.507059e+37
  %v369 = vand.u32 %v357, 2147483648
  %v370 = vor.u32 1.1754944e-38, %v369
  %v371 = vsel %vm368, %v370, %v366
  %v372 = vmul.f32 1.0, %v371
  %v373 = vtanh.pop %v353
  %v374 = vmul.f32 %v372, %v316
  %376 = vrot.lane.b32.xlu0 %v373, 64
  %v377 = vpop.permute.xlu0 %376
  %v379 = vmul.f32 %v372, %v377
  %381 = vrot.lane.b32.xlu0 %v379, 32
  %v382 = vpop.permute.xlu0 %381
  %v384 = vadd.f32 %v374, %v382
  %v385 = vtanh.pop %v384
  %387 = vrot.lane.b32.xlu0 %v385, 64
  %v388 = vpop.permute.xlu0 %387
  %v390 = vmul.f32 %v372, %v388
  %392 = vrot.lane.b32.xlu0 %v390, 32
  %v393 = vpop.permute.xlu0 %392
  %s395 = scalar_lea.vmem [#allocation2], 24
  %396 = vst.msk [vmem:[%s395] sm:$0xff] %vm48, %v393
  %s397 = scalar_lea.vmem [#allocation3], 32
  %v398 = vld [vmem:[%s397] sm:$0xff]
  %v399 = vsel %vm48, %v393, 0
  %401 = vmatpush.msra.mxu0 0.0
  %402 = vmatpush.msra.mxu0 0.0
  %403 = vmatpush.msra.mxu0 0.0
  %404 = vmatpush.msra.mxu0 0.0
  %405 = vmatpush.msra.mxu0 0.0
  %406 = vmatpush.msra.mxu0 0.0
  %407 = vmatpush.msra.mxu0 0.0
  %408 = vmatpush.msra.mxu0 0.0
  %409 = vmatpush.msra.mxu0 0.0
  %410 = vmatpush.msra.mxu0 0.0
  %411 = vmatpush.msra.mxu0 0.0
  %412 = vmatpush.msra.mxu0 0.0
  %413 = vmatpush.msra.mxu0 %v125
  %414 = vmatpush.msra.mxu0 %v124
  %415 = vmatpush.msra.mxu0 %v123
  %416 = vmatpush.msra.mxu0 %v122
  %417 = vmatmul.f32.gmra.mxu0 %v399
  %v418 = vpop.f32.mrf.mxu0
  %v419 = vadd.f32 0.0, %v418
  %420 = vdwg.mxu0
  %v421 = vadd.f32 %v398, %v419
  %v422 = vxor.u32 %v421, 2147483648
  %v423 = vmul.f32 %v422, 1.442695
  %v424 = vpow.pop %v423
  %v425 = vadd.f32 %v424, 1.0
  %v426 = vrcp.pop %v425
  %v427 = vmul.f32 %v425, %v426
  %v428 = vsub.f32 1.0, %v427
  %v429 = vmul.f32 %v426, %v428
  %v430 = vadd.f32 %v426, %v429
  %vm431 = vweird.f32 %v425
  %vm432 = vweird.f32 %v426
  %vm433 = vmor %vm431, %vm432
  %v434 = vsel %vm433, %v426, %v430
  %v435 = vand.u32 2147483647, %v425
  %vm436 = vcmp.eq.f32.partialorder %v435, 8.507059e+37
  %v437 = vand.u32 %v425, 2147483648
  %v438 = vor.u32 1.1754944e-38, %v437
  %v439 = vsel %vm436, %v438, %v434
  %v440 = vmul.f32 1.0, %v439
  %v441 = vtanh.pop %v421
  %v442 = vmul.f32 %v440, %v384
  %444 = vrot.lane.b32.xlu0 %v441, 64
  %v445 = vpop.permute.xlu0 %444
  %v447 = vmul.f32 %v440, %v445
  %449 = vrot.lane.b32.xlu0 %v447, 32
  %v450 = vpop.permute.xlu0 %449
  %v452 = vadd.f32 %v442, %v450
  %v453 = vtanh.pop %v452
  %455 = vrot.lane.b32.xlu0 %v453, 64
  %v456 = vpop.permute.xlu0 %455
  %v458 = vmul.f32 %v440, %v456
  %460 = vrot.lane.b32.xlu0 %v458, 32
  %v461 = vpop.permute.xlu0 %460
  %s463 = scalar_lea.vmem [#allocation2], 32
  %464 = vst.msk [vmem:[%s463] sm:$0xff] %vm48, %v461
  %s465 = scalar_lea.vmem [#allocation3], 40
  %v466 = vld [vmem:[%s465] sm:$0xff]
  %v467 = vsel %vm48, %v461, 0
  %469 = vmatpush.msra.mxu0 0.0
  %470 = vmatpush.msra.mxu0 0.0
  %471 = vmatpush.msra.mxu0 0.0
  %472 = vmatpush.msra.mxu0 0.0
  %473 = vmatpush.msra.mxu0 0.0
  %474 = vmatpush.msra.mxu0 0.0
  %475 = vmatpush.msra.mxu0 0.0
  %476 = vmatpush.msra.mxu0 0.0
  %477 = vmatpush.msra.mxu0 0.0
  %478 = vmatpush.msra.mxu0 0.0
  %479 = vmatpush.msra.mxu0 0.0
  %480 = vmatpush.msra.mxu0 0.0
  %481 = vmatpush.msra.mxu0 %v125
  %482 = vmatpush.msra.mxu0 %v124
  %483 = vmatpush.msra.mxu0 %v123
  %484 = vmatpush.msra.mxu0 %v122
  %485 = vmatmul.f32.gmra.mxu0 %v467
  %v486 = vpop.f32.mrf.mxu0
  %v487 = vadd.f32 0.0, %v486
  %488 = vdwg.mxu0
  %v489 = vadd.f32 %v466, %v487
  %v490 = vxor.u32 %v489, 2147483648
  %v491 = vmul.f32 %v490, 1.442695
  %v492 = vpow.pop %v491
  %v493 = vadd.f32 %v492, 1.0
  %v494 = vrcp.pop %v493
  %v495 = vmul.f32 %v493, %v494
  %v496 = vsub.f32 1.0, %v495
  %v497 = vmul.f32 %v494, %v496
  %v498 = vadd.f32 %v494, %v497
  %vm499 = vweird.f32 %v493
  %vm500 = vweird.f32 %v494
  %vm501 = vmor %vm499, %vm500
  %v502 = vsel %vm501, %v494, %v498
  %v503 = vand.u32 2147483647, %v493
  %vm504 = vcmp.eq.f32.partialorder %v503, 8.507059e+37
  %v505 = vand.u32 %v493, 2147483648
  %v506 = vor.u32 1.1754944e-38, %v505
  %v507 = vsel %vm504, %v506, %v502
  %v508 = vmul.f32 1.0, %v507
  %v509 = vtanh.pop %v489
  %v510 = vmul.f32 %v508, %v452
  %512 = vrot.lane.b32.xlu0 %v509, 64
  %v513 = vpop.permute.xlu0 %512
  %v515 = vmul.f32 %v508, %v513
  %517 = vrot.lane.b32.xlu0 %v515, 32
  %v518 = vpop.permute.xlu0 %517
  %v520 = vadd.f32 %v510, %v518
  %v521 = vtanh.pop %v520
  %523 = vrot.lane.b32.xlu0 %v521, 64
  %v524 = vpop.permute.xlu0 %523
  %v526 = vmul.f32 %v508, %v524
  %528 = vrot.lane.b32.xlu0 %v526, 32
  %v529 = vpop.permute.xlu0 %528
  %s531 = scalar_lea.vmem [#allocation2], 40
  %532 = vst.msk [vmem:[%s531] sm:$0xff] %vm48, %v529
  %s533 = scalar_lea.vmem [#allocation3], 48
  %v534 = vld [vmem:[%s533] sm:$0xff]
  %v535 = vsel %vm48, %v529, 0
  %537 = vmatpush.msra.mxu0 0.0
  %538 = vmatpush.msra.mxu0 0.0
  %539 = vmatpush.msra.mxu0 0.0
  %540 = vmatpush.msra.mxu0 0.0
  %541 = vmatpush.msra.mxu0 0.0
  %542 = vmatpush.msra.mxu0 0.0
  %543 = vmatpush.msra.mxu0 0.0
  %544 = vmatpush.msra.mxu0 0.0
  %545 = vmatpush.msra.mxu0 0.0
  %546 = vmatpush.msra.mxu0 0.0
  %547 = vmatpush.msra.mxu0 0.0
  %548 = vmatpush.msra.mxu0 0.0
  %549 = vmatpush.msra.mxu0 %v125
  %550 = vmatpush.msra.mxu0 %v124
  %551 = vmatpush.msra.mxu0 %v123
  %552 = vmatpush.msra.mxu0 %v122
  %553 = vmatmul.f32.gmra.mxu0 %v535
  %v554 = vpop.f32.mrf.mxu0
  %v555 = vadd.f32 0.0, %v554
  %556 = vdwg.mxu0
  %v557 = vadd.f32 %v534, %v555
  %v558 = vxor.u32 %v557, 2147483648
  %v559 = vmul.f32 %v558, 1.442695
  %v560 = vpow.pop %v559
  %v561 = vadd.f32 %v560, 1.0
  %v562 = vrcp.pop %v561
  %v563 = vmul.f32 %v561, %v562
  %v564 = vsub.f32 1.0, %v563
  %v565 = vmul.f32 %v562, %v564
  %v566 = vadd.f32 %v562, %v565
  %vm567 = vweird.f32 %v561
  %vm568 = vweird.f32 %v562
  %vm569 = vmor %vm567, %vm568
  %v570 = vsel %vm569, %v562, %v566
  %v571 = vand.u32 2147483647, %v561
  %vm572 = vcmp.eq.f32.partialorder %v571, 8.507059e+37
  %v573 = vand.u32 %v561, 2147483648
  %v574 = vor.u32 1.1754944e-38, %v573
  %v575 = vsel %vm572, %v574, %v570
  %v576 = vmul.f32 1.0, %v575
  %v577 = vtanh.pop %v557
  %v578 = vmul.f32 %v576, %v520
  %580 = vrot.lane.b32.xlu0 %v577, 64
  %v581 = vpop.permute.xlu0 %580
  %v583 = vmul.f32 %v576, %v581
  %585 = vrot.lane.b32.xlu0 %v583, 32
  %v586 = vpop.permute.xlu0 %585
  %v588 = vadd.f32 %v578, %v586
  %v589 = vtanh.pop %v588
  %591 = vrot.lane.b32.xlu0 %v589, 64
  %v592 = vpop.permute.xlu0 %591
  %v594 = vmul.f32 %v576, %v592
  %596 = vrot.lane.b32.xlu0 %v594, 32
  %v597 = vpop.permute.xlu0 %596
  %s599 = scalar_lea.vmem [#allocation2], 48
  %600 = vst.msk [vmem:[%s599] sm:$0xff] %vm48, %v597
  %s601 = scalar_lea.vmem [#allocation3], 56
  %v602 = vld [vmem:[%s601] sm:$0xff]
  %v603 = vsel %vm48, %v597, 0
  %605 = vmatpush.msra.mxu0 0.0
  %606 = vmatpush.msra.mxu0 0.0
  %607 = vmatpush.msra.mxu0 0.0
  %608 = vmatpush.msra.mxu0 0.0
  %609 = vmatpush.msra.mxu0 0.0
  %610 = vmatpush.msra.mxu0 0.0
  %611 = vmatpush.msra.mxu0 0.0
  %612 = vmatpush.msra.mxu0 0.0
  %613 = vmatpush.msra.mxu0 0.0
  %614 = vmatpush.msra.mxu0 0.0
  %615 = vmatpush.msra.mxu0 0.0
  %616 = vmatpush.msra.mxu0 0.0
  %617 = vmatpush.msra.mxu0 %v125
  %618 = vmatpush.msra.mxu0 %v124
  %619 = vmatpush.msra.mxu0 %v123
  %620 = vmatpush.msra.mxu0 %v122
  %621 = vmatmul.f32.gmra.mxu0 %v603
  %v622 = vpop.f32.mrf.mxu0
  %v623 = vadd.f32 0.0, %v622
  %624 = vdwg.mxu0
  %v625 = vadd.f32 %v602, %v623
  %v626 = vxor.u32 %v625, 2147483648
  %v627 = vmul.f32 %v626, 1.442695
  %v628 = vpow.pop %v627
  %v629 = vadd.f32 %v628, 1.0
  %v630 = vrcp.pop %v629
  %v631 = vmul.f32 %v629, %v630
  %v632 = vsub.f32 1.0, %v631
  %v633 = vmul.f32 %v630, %v632
  %v634 = vadd.f32 %v630, %v633
  %vm635 = vweird.f32 %v629
  %vm636 = vweird.f32 %v630
  %vm637 = vmor %vm635, %vm636
  %v638 = vsel %vm637, %v630, %v634
  %v639 = vand.u32 2147483647, %v629
  %vm640 = vcmp.eq.f32.partialorder %v639, 8.507059e+37
  %v641 = vand.u32 %v629, 2147483648
  %v642 = vor.u32 1.1754944e-38, %v641
  %v643 = vsel %vm640, %v642, %v638
  %v644 = vmul.f32 1.0, %v643
  %v645 = vtanh.pop %v625
  %v646 = vmul.f32 %v644, %v588
  %648 = vrot.lane.b32.xlu0 %v645, 64
  %v649 = vpop.permute.xlu0 %648
  %v651 = vmul.f32 %v644, %v649
  %653 = vrot.lane.b32.xlu0 %v651, 32
  %v654 = vpop.permute.xlu0 %653
  %v656 = vadd.f32 %v646, %v654
  %v657 = vtanh.pop %v656
  %659 = vrot.lane.b32.xlu0 %v657, 64
  %v660 = vpop.permute.xlu0 %659
  %v662 = vmul.f32 %v644, %v660
  %664 = vrot.lane.b32.xlu0 %v662, 32
  %v665 = vpop.permute.xlu0 %664
  %s667 = scalar_lea.vmem [#allocation2], 56
  %668 = vst.msk [vmem:[%s667] sm:$0xff] %vm48, %v665
  %v669 = vld [vmem:[#allocation2] sm:$0xff]
  %v670 = vld [vmem:[#allocation2 + $0x8] sm:$0xff]
  %v671 = vld [vmem:[#allocation2 + $0x10] sm:$0xff]
  %v672 = vld [vmem:[#allocation2 + $0x18] sm:$0xff]
  %v673 = vld [vmem:[#allocation2 + $0x20] sm:$0xff]
  %v674 = vld [vmem:[#allocation2 + $0x28] sm:$0xff]
  %v675 = vld [vmem:[#allocation2 + $0x30] sm:$0xff]
  %v676 = vld [vmem:[#allocation2 + $0x38] sm:$0xff]
  %v677 = vld [vmem:[%s2] sm:$0xff]
  %v678 = vld [vmem:[%s2 + $0x8] sm:$0xff]
  %v679 = vld [vmem:[%s2 + $0x10] sm:$0xff]
  %v680 = vld [vmem:[%s2 + $0x18] sm:$0xff]
  %v681 = vld [vmem:[%s6] sm:$0x1]
  %v683 = vperm.slane %v681, 0
  %v686 = vsel %vm48, %v669, 0
  %v689 = vsel %vm48, %v670, 0
  %v692 = vsel %vm48, %v671, 0
  %v695 = vsel %vm48, %v672, 0
  %v698 = vsel %vm48, %v673, 0
  %v701 = vsel %vm48, %v674, 0
  %v704 = vsel %vm48, %v675, 0
  %v707 = vsel %vm48, %v676, 0
  %709 = vmatpush.msra.mxu0 0.0
  %710 = vmatpush.msra.mxu0 0.0
  %711 = vmatpush.msra.mxu0 0.0
  %712 = vmatpush.msra.mxu0 0.0
  %713 = vmatpush.msra.mxu0 0.0
  %714 = vmatpush.msra.mxu0 0.0
  %715 = vmatpush.msra.mxu0 0.0
  %716 = vmatpush.msra.mxu0 0.0
  %717 = vmatpush.msra.mxu0 0.0
  %718 = vmatpush.msra.mxu0 0.0
  %719 = vmatpush.msra.mxu0 0.0
  %720 = vmatpush.msra.mxu0 0.0
  %721 = vmatpush.msra.mxu0 %v680
  %722 = vmatpush.msra.mxu0 %v679
  %723 = vmatpush.msra.mxu0 %v678
  %724 = vmatpush.msra.mxu0 %v677
  %725 = vmatmul.f32.gmra.mxu0 %v686
  %v726 = vpop.f32.mrf.mxu0
  %v727 = vadd.f32 %v683, %v726
  %728 = vmatmul.f32.gmra.mxu0 %v689
  %v729 = vpop.f32.mrf.mxu0
  %v730 = vadd.f32 %v683, %v729
  %731 = vmatmul.f32.gmra.mxu0 %v692
  %v732 = vpop.f32.mrf.mxu0
  %v733 = vadd.f32 %v683, %v732
  %734 = vmatmul.f32.gmra.mxu0 %v695
  %v735 = vpop.f32.mrf.mxu0
  %v736 = vadd.f32 %v683, %v735
  %737 = vmatmul.f32.gmra.mxu0 %v698
  %v738 = vpop.f32.mrf.mxu0
  %v739 = vadd.f32 %v683, %v738
  %740 = vmatmul.f32.gmra.mxu0 %v701
  %v741 = vpop.f32.mrf.mxu0
  %v742 = vadd.f32 %v683, %v741
  %743 = vmatmul.f32.gmra.mxu0 %v704
  %v744 = vpop.f32.mrf.mxu0
  %v745 = vadd.f32 %v683, %v744
  %746 = vmatmul.f32.gmra.mxu0 %v707
  %v747 = vpop.f32.mrf.mxu0
  %v748 = vadd.f32 %v683, %v747
  %749 = vdwg.mxu0
  %750 = vst [vmem:[#allocation3] sm:$0xff] %v727
  %751 = vst [vmem:[#allocation3 + $0x8] sm:$0xff] %v730
  %752 = vst [vmem:[#allocation3 + $0x10] sm:$0xff] %v733
  %753 = vst [vmem:[#allocation3 + $0x18] sm:$0xff] %v736
  %754 = vst [vmem:[#allocation3 + $0x20] sm:$0xff] %v739
  %755 = vst [vmem:[#allocation3 + $0x28] sm:$0xff] %v742
  %756 = vst [vmem:[#allocation3 + $0x30] sm:$0xff] %v745
  %757 = vst [vmem:[#allocation3 + $0x38] sm:$0xff] %v748
  %v758 = vld [vmem:[%s4] sm:$0xff]
  %v759 = vld [vmem:[%s4 + $0x8] sm:$0xff]
  %v760 = vld [vmem:[%s4 + $0x10] sm:$0xff]
  %v761 = vld [vmem:[%s4 + $0x18] sm:$0xff]
  %v762 = vld [vmem:[#allocation3] sm:$0xff]
  %763 = vmatpush.msra.mxu0 0.0
  %764 = vmatpush.msra.mxu0 0.0
  %765 = vmatpush.msra.mxu0 0.0
  %766 = vmatpush.msra.mxu0 0.0
  %767 = vmatpush.msra.mxu0 0.0
  %768 = vmatpush.msra.mxu0 0.0
  %769 = vmatpush.msra.mxu0 0.0
  %770 = vmatpush.msra.mxu0 0.0
  %771 = vmatpush.msra.mxu0 0.0
  %772 = vmatpush.msra.mxu0 0.0
  %773 = vmatpush.msra.mxu0 0.0
  %774 = vmatpush.msra.mxu0 0.0
  %775 = vmatpush.msra.mxu0 %v761
  %776 = vmatpush.msra.mxu0 %v760
  %777 = vmatpush.msra.mxu0 %v759
  %778 = vmatpush.msra.mxu0 %v758
  %779 = vmatmul.f32.gmra.mxu0 %v128
  %v780 = vpop.f32.mrf.mxu0
  %v781 = vadd.f32 0.0, %v780
  %782 = vdwg.mxu0
  %v783 = vadd.f32 %v762, %v781
  %v784 = vxor.u32 %v783, 2147483648
  %v785 = vmul.f32 %v784, 1.442695
  %v786 = vpow.pop %v785
  %v787 = vadd.f32 %v786, 1.0
  %v788 = vrcp.pop %v787
  %v789 = vmul.f32 %v787, %v788
  %v790 = vsub.f32 1.0, %v789
  %v791 = vmul.f32 %v788, %v790
  %v792 = vadd.f32 %v788, %v791
  %vm793 = vweird.f32 %v787
  %vm794 = vweird.f32 %v788
  %vm795 = vmor %vm793, %vm794
  %v796 = vsel %vm795, %v788, %v792
  %v797 = vand.u32 2147483647, %v787
  %vm798 = vcmp.eq.f32.partialorder %v797, 8.507059e+37
  %v799 = vand.u32 %v787, 2147483648
  %v800 = vor.u32 1.1754944e-38, %v799
  %v801 = vsel %vm798, %v800, %v796
  %v802 = vmul.f32 1.0, %v801
  %v803 = vtanh.pop %v783
  %v804 = vmul.f32 %v802, 0.0
  %806 = vrot.lane.b32.xlu0 %v803, 64
  %v807 = vpop.permute.xlu0 %806
  %v809 = vmul.f32 %v802, %v807
  %811 = vrot.lane.b32.xlu0 %v809, 32
  %v812 = vpop.permute.xlu0 %811
  %v814 = vadd.f32 %v804, %v812
  %v815 = vtanh.pop %v814
  %817 = vrot.lane.b32.xlu0 %v815, 64
  %v818 = vpop.permute.xlu0 %817
  %v820 = vmul.f32 %v802, %v818
  %v821 = vld [vmem:[%s193] sm:$0xff]
  %823 = vrot.lane.b32.xlu0 %v820, 32
  %v824 = vpop.permute.xlu0 %823
  %v825 = vsel %vm48, %v824, 0
  %827 = vmatpush.msra.mxu0 0.0
  %828 = vmatpush.msra.mxu0 0.0
  %829 = vmatpush.msra.mxu0 0.0
  %830 = vmatpush.msra.mxu0 0.0
  %831 = vmatpush.msra.mxu0 0.0
  %832 = vmatpush.msra.mxu0 0.0
  %833 = vmatpush.msra.mxu0 0.0
  %834 = vmatpush.msra.mxu0 0.0
  %835 = vmatpush.msra.mxu0 0.0
  %836 = vmatpush.msra.mxu0 0.0
  %837 = vmatpush.msra.mxu0 0.0
  %838 = vmatpush.msra.mxu0 0.0
  %839 = vmatpush.msra.mxu0 %v761
  %840 = vmatpush.msra.mxu0 %v760
  %841 = vmatpush.msra.mxu0 %v759
  %842 = vmatpush.msra.mxu0 %v758
  %843 = vmatmul.f32.gmra.mxu0 %v825
  %v844 = vpop.f32.mrf.mxu0
  %v845 = vadd.f32 0.0, %v844
  %846 = vdwg.mxu0
  %v847 = vadd.f32 %v821, %v845
  %v848 = vxor.u32 %v847, 2147483648
  %v849 = vmul.f32 %v848, 1.442695
  %v850 = vpow.pop %v849
  %v851 = vadd.f32 %v850, 1.0
  %v852 = vrcp.pop %v851
  %v853 = vmul.f32 %v851, %v852
  %v854 = vsub.f32 1.0, %v853
  %v855 = vmul.f32 %v852, %v854
  %v856 = vadd.f32 %v852, %v855
  %vm857 = vweird.f32 %v851
  %vm858 = vweird.f32 %v852
  %vm859 = vmor %vm857, %vm858
  %v860 = vsel %vm859, %v852, %v856
  %v861 = vand.u32 2147483647, %v851
  %vm862 = vcmp.eq.f32.partialorder %v861, 8.507059e+37
  %v863 = vand.u32 %v851, 2147483648
  %v864 = vor.u32 1.1754944e-38, %v863
  %v865 = vsel %vm862, %v864, %v860
  %v866 = vmul.f32 1.0, %v865
  %v867 = vtanh.pop %v847
  %v868 = vmul.f32 %v866, %v814
  %870 = vrot.lane.b32.xlu0 %v867, 64
  %v871 = vpop.permute.xlu0 %870
  %v873 = vmul.f32 %v866, %v871
  %875 = vrot.lane.b32.xlu0 %v873, 32
  %v876 = vpop.permute.xlu0 %875
  %v878 = vadd.f32 %v868, %v876
  %v879 = vtanh.pop %v878
  %881 = vrot.lane.b32.xlu0 %v879, 64
  %v882 = vpop.permute.xlu0 %881
  %v884 = vmul.f32 %v866, %v882
  %v885 = vld [vmem:[%s261] sm:$0xff]
  %887 = vrot.lane.b32.xlu0 %v884, 32
  %v888 = vpop.permute.xlu0 %887
  %v889 = vsel %vm48, %v888, 0
  %891 = vmatpush.msra.mxu0 0.0
  %892 = vmatpush.msra.mxu0 0.0
  %893 = vmatpush.msra.mxu0 0.0
  %894 = vmatpush.msra.mxu0 0.0
  %895 = vmatpush.msra.mxu0 0.0
  %896 = vmatpush.msra.mxu0 0.0
  %897 = vmatpush.msra.mxu0 0.0
  %898 = vmatpush.msra.mxu0 0.0
  %899 = vmatpush.msra.mxu0 0.0
  %900 = vmatpush.msra.mxu0 0.0
  %901 = vmatpush.msra.mxu0 0.0
  %902 = vmatpush.msra.mxu0 0.0
  %903 = vmatpush.msra.mxu0 %v761
  %904 = vmatpush.msra.mxu0 %v760
  %905 = vmatpush.msra.mxu0 %v759
  %906 = vmatpush.msra.mxu0 %v758
  %907 = vmatmul.f32.gmra.mxu0 %v889
  %v908 = vpop.f32.mrf.mxu0
  %v909 = vadd.f32 0.0, %v908
  %910 = vdwg.mxu0
  %v911 = vadd.f32 %v885, %v909
  %v912 = vxor.u32 %v911, 2147483648
  %v913 = vmul.f32 %v912, 1.442695
  %v914 = vpow.pop %v913
  %v915 = vadd.f32 %v914, 1.0
  %v916 = vrcp.pop %v915
  %v917 = vmul.f32 %v915, %v916
  %v918 = vsub.f32 1.0, %v917
  %v919 = vmul.f32 %v916, %v918
  %v920 = vadd.f32 %v916, %v919
  %vm921 = vweird.f32 %v915
  %vm922 = vweird.f32 %v916
  %vm923 = vmor %vm921, %vm922
  %v924 = vsel %vm923, %v916, %v920
  %v925 = vand.u32 2147483647, %v915
  %vm926 = vcmp.eq.f32.partialorder %v925, 8.507059e+37
  %v927 = vand.u32 %v915, 2147483648
  %v928 = vor.u32 1.1754944e-38, %v927
  %v929 = vsel %vm926, %v928, %v924
  %v930 = vmul.f32 1.0, %v929
  %v931 = vtanh.pop %v911
  %v932 = vmul.f32 %v930, %v878
  %934 = vrot.lane.b32.xlu0 %v931, 64
  %v935 = vpop.permute.xlu0 %934
  %v937 = vmul.f32 %v930, %v935
  %939 = vrot.lane.b32.xlu0 %v937, 32
  %v940 = vpop.permute.xlu0 %939
  %v942 = vadd.f32 %v932, %v940
  %v943 = vtanh.pop %v942
  %945 = vrot.lane.b32.xlu0 %v943, 64
  %v946 = vpop.permute.xlu0 %945
  %v948 = vmul.f32 %v930, %v946
  %v949 = vld [vmem:[%s329] sm:$0xff]
  %951 = vrot.lane.b32.xlu0 %v948, 32
  %v952 = vpop.permute.xlu0 %951
  %v953 = vsel %vm48, %v952, 0
  %955 = vmatpush.msra.mxu0 0.0
  %956 = vmatpush.msra.mxu0 0.0
  %957 = vmatpush.msra.mxu0 0.0
  %958 = vmatpush.msra.mxu0 0.0
  %959 = vmatpush.msra.mxu0 0.0
  %960 = vmatpush.msra.mxu0 0.0
  %961 = vmatpush.msra.mxu0 0.0
  %962 = vmatpush.msra.mxu0 0.0
  %963 = vmatpush.msra.mxu0 0.0
  %964 = vmatpush.msra.mxu0 0.0
  %965 = vmatpush.msra.mxu0 0.0
  %966 = vmatpush.msra.mxu0 0.0
  %967 = vmatpush.msra.mxu0 %v761
  %968 = vmatpush.msra.mxu0 %v760
  %969 = vmatpush.msra.mxu0 %v759
  %970 = vmatpush.msra.mxu0 %v758
  %971 = vmatmul.f32.gmra.mxu0 %v953
  %v972 = vpop.f32.mrf.mxu0
  %v973 = vadd.f32 0.0, %v972
  %974 = vdwg.mxu0
  %v975 = vadd.f32 %v949, %v973
  %v976 = vxor.u32 %v975, 2147483648
  %v977 = vmul.f32 %v976, 1.442695
  %v978 = vpow.pop %v977
  %v979 = vadd.f32 %v978, 1.0
  %v980 = vrcp.pop %v979
  %v981 = vmul.f32 %v979, %v980
  %v982 = vsub.f32 1.0, %v981
  %v983 = vmul.f32 %v980, %v982
  %v984 = vadd.f32 %v980, %v983
  %vm985 = vweird.f32 %v979
  %vm986 = vweird.f32 %v980
  %vm987 = vmor %vm985, %vm986
  %v988 = vsel %vm987, %v980, %v984
  %v989 = vand.u32 2147483647, %v979
  %vm990 = vcmp.eq.f32.partialorder %v989, 8.507059e+37
  %v991 = vand.u32 %v979, 2147483648
  %v992 = vor.u32 1.1754944e-38, %v991
  %v993 = vsel %vm990, %v992, %v988
  %v994 = vmul.f32 1.0, %v993
  %v995 = vtanh.pop %v975
  %v996 = vmul.f32 %v994, %v942
  %998 = vrot.lane.b32.xlu0 %v995, 64
  %v999 = vpop.permute.xlu0 %998
  %v1001 = vmul.f32 %v994, %v999
  %1003 = vrot.lane.b32.xlu0 %v1001, 32
  %v1004 = vpop.permute.xlu0 %1003
  %v1006 = vadd.f32 %v996, %v1004
  %v1007 = vtanh.pop %v1006
  %1009 = vrot.lane.b32.xlu0 %v1007, 64
  %v1010 = vpop.permute.xlu0 %1009
  %v1012 = vmul.f32 %v994, %v1010
  %v1013 = vld [vmem:[%s397] sm:$0xff]
  %1015 = vrot.lane.b32.xlu0 %v1012, 32
  %v1016 = vpop.permute.xlu0 %1015
  %v1017 = vsel %vm48, %v1016, 0
  %1019 = vmatpush.msra.mxu0 0.0
  %1020 = vmatpush.msra.mxu0 0.0
  %1021 = vmatpush.msra.mxu0 0.0
  %1022 = vmatpush.msra.mxu0 0.0
  %1023 = vmatpush.msra.mxu0 0.0
  %1024 = vmatpush.msra.mxu0 0.0
  %1025 = vmatpush.msra.mxu0 0.0
  %1026 = vmatpush.msra.mxu0 0.0
  %1027 = vmatpush.msra.mxu0 0.0
  %1028 = vmatpush.msra.mxu0 0.0
  %1029 = vmatpush.msra.mxu0 0.0
  %1030 = vmatpush.msra.mxu0 0.0
  %1031 = vmatpush.msra.mxu0 %v761
  %1032 = vmatpush.msra.mxu0 %v760
  %1033 = vmatpush.msra.mxu0 %v759
  %1034 = vmatpush.msra.mxu0 %v758
  %1035 = vmatmul.f32.gmra.mxu0 %v1017
  %v1036 = vpop.f32.mrf.mxu0
  %v1037 = vadd.f32 0.0, %v1036
  %1038 = vdwg.mxu0
  %v1039 = vadd.f32 %v1013, %v1037
  %v1040 = vxor.u32 %v1039, 2147483648
  %v1041 = vmul.f32 %v1040, 1.442695
  %v1042 = vpow.pop %v1041
  %v1043 = vadd.f32 %v1042, 1.0
  %v1044 = vrcp.pop %v1043
  %v1045 = vmul.f32 %v1043, %v1044
  %v1046 = vsub.f32 1.0, %v1045
  %v1047 = vmul.f32 %v1044, %v1046
  %v1048 = vadd.f32 %v1044, %v1047
  %vm1049 = vweird.f32 %v1043
  %vm1050 = vweird.f32 %v1044
  %vm1051 = vmor %vm1049, %vm1050
  %v1052 = vsel %vm1051, %v1044, %v1048
  %v1053 = vand.u32 2147483647, %v1043
  %vm1054 = vcmp.eq.f32.partialorder %v1053, 8.507059e+37
  %v1055 = vand.u32 %v1043, 2147483648
  %v1056 = vor.u32 1.1754944e-38, %v1055
  %v1057 = vsel %vm1054, %v1056, %v1052
  %v1058 = vmul.f32 1.0, %v1057
  %v1059 = vtanh.pop %v1039
  %v1060 = vmul.f32 %v1058, %v1006
  %1062 = vrot.lane.b32.xlu0 %v1059, 64
  %v1063 = vpop.permute.xlu0 %1062
  %v1065 = vmul.f32 %v1058, %v1063
  %1067 = vrot.lane.b32.xlu0 %v1065, 32
  %v1068 = vpop.permute.xlu0 %1067
  %v1070 = vadd.f32 %v1060, %v1068
  %v1071 = vtanh.pop %v1070
  %1073 = vrot.lane.b32.xlu0 %v1071, 64
  %v1074 = vpop.permute.xlu0 %1073
  %v1076 = vmul.f32 %v1058, %v1074
  %v1077 = vld [vmem:[%s465] sm:$0xff]
  %1079 = vrot.lane.b32.xlu0 %v1076, 32
  %v1080 = vpop.permute.xlu0 %1079
  %v1081 = vsel %vm48, %v1080, 0
  %1083 = vmatpush.msra.mxu0 0.0
  %1084 = vmatpush.msra.mxu0 0.0
  %1085 = vmatpush.msra.mxu0 0.0
  %1086 = vmatpush.msra.mxu0 0.0
  %1087 = vmatpush.msra.mxu0 0.0
  %1088 = vmatpush.msra.mxu0 0.0
  %1089 = vmatpush.msra.mxu0 0.0
  %1090 = vmatpush.msra.mxu0 0.0
  %1091 = vmatpush.msra.mxu0 0.0
  %1092 = vmatpush.msra.mxu0 0.0
  %1093 = vmatpush.msra.mxu0 0.0
  %1094 = vmatpush.msra.mxu0 0.0
  %1095 = vmatpush.msra.mxu0 %v761
  %1096 = vmatpush.msra.mxu0 %v760
  %1097 = vmatpush.msra.mxu0 %v759
  %1098 = vmatpush.msra.mxu0 %v758
  %1099 = vmatmul.f32.gmra.mxu0 %v1081
  %v1100 = vpop.f32.mrf.mxu0
  %v1101 = vadd.f32 0.0, %v1100
  %1102 = vdwg.mxu0
  %v1103 = vadd.f32 %v1077, %v1101
  %v1104 = vxor.u32 %v1103, 2147483648
  %v1105 = vmul.f32 %v1104, 1.442695
  %v1106 = vpow.pop %v1105
  %v1107 = vadd.f32 %v1106, 1.0
  %v1108 = vrcp.pop %v1107
  %v1109 = vmul.f32 %v1107, %v1108
  %v1110 = vsub.f32 1.0, %v1109
  %v1111 = vmul.f32 %v1108, %v1110
  %v1112 = vadd.f32 %v1108, %v1111
  %vm1113 = vweird.f32 %v1107
  %vm1114 = vweird.f32 %v1108
  %vm1115 = vmor %vm1113, %vm1114
  %v1116 = vsel %vm1115, %v1108, %v1112
  %v1117 = vand.u32 2147483647, %v1107
  %vm1118 = vcmp.eq.f32.partialorder %v1117, 8.507059e+37
  %v1119 = vand.u32 %v1107, 2147483648
  %v1120 = vor.u32 1.1754944e-38, %v1119
  %v1121 = vsel %vm1118, %v1120, %v1116
  %v1122 = vmul.f32 1.0, %v1121
  %v1123 = vtanh.pop %v1103
  %v1124 = vmul.f32 %v1122, %v1070
  %1126 = vrot.lane.b32.xlu0 %v1123, 64
  %v1127 = vpop.permute.xlu0 %1126
  %v1129 = vmul.f32 %v1122, %v1127
  %1131 = vrot.lane.b32.xlu0 %v1129, 32
  %v1132 = vpop.permute.xlu0 %1131
  %v1134 = vadd.f32 %v1124, %v1132
  %v1135 = vtanh.pop %v1134
  %1137 = vrot.lane.b32.xlu0 %v1135, 64
  %v1138 = vpop.permute.xlu0 %1137
  %v1140 = vmul.f32 %v1122, %v1138
  %v1141 = vld [vmem:[%s533] sm:$0xff]
  %1143 = vrot.lane.b32.xlu0 %v1140, 32
  %v1144 = vpop.permute.xlu0 %1143
  %v1145 = vsel %vm48, %v1144, 0
  %1147 = vmatpush.msra.mxu0 0.0
  %1148 = vmatpush.msra.mxu0 0.0
  %1149 = vmatpush.msra.mxu0 0.0
  %1150 = vmatpush.msra.mxu0 0.0
  %1151 = vmatpush.msra.mxu0 0.0
  %1152 = vmatpush.msra.mxu0 0.0
  %1153 = vmatpush.msra.mxu0 0.0
  %1154 = vmatpush.msra.mxu0 0.0
  %1155 = vmatpush.msra.mxu0 0.0
  %1156 = vmatpush.msra.mxu0 0.0
  %1157 = vmatpush.msra.mxu0 0.0
  %1158 = vmatpush.msra.mxu0 0.0
  %1159 = vmatpush.msra.mxu0 %v761
  %1160 = vmatpush.msra.mxu0 %v760
  %1161 = vmatpush.msra.mxu0 %v759
  %1162 = vmatpush.msra.mxu0 %v758
  %1163 = vmatmul.f32.gmra.mxu0 %v1145
  %v1164 = vpop.f32.mrf.mxu0
  %v1165 = vadd.f32 0.0, %v1164
  %1166 = vdwg.mxu0
  %v1167 = vadd.f32 %v1141, %v1165
  %v1168 = vxor.u32 %v1167, 2147483648
  %v1169 = vmul.f32 %v1168, 1.442695
  %v1170 = vpow.pop %v1169
  %v1171 = vadd.f32 %v1170, 1.0
  %v1172 = vrcp.pop %v1171
  %v1173 = vmul.f32 %v1171, %v1172
  %v1174 = vsub.f32 1.0, %v1173
  %v1175 = vmul.f32 %v1172, %v1174
  %v1176 = vadd.f32 %v1172, %v1175
  %vm1177 = vweird.f32 %v1171
  %vm1178 = vweird.f32 %v1172
  %vm1179 = vmor %vm1177, %vm1178
  %v1180 = vsel %vm1179, %v1172, %v1176
  %v1181 = vand.u32 2147483647, %v1171
  %vm1182 = vcmp.eq.f32.partialorder %v1181, 8.507059e+37
  %v1183 = vand.u32 %v1171, 2147483648
  %v1184 = vor.u32 1.1754944e-38, %v1183
  %v1185 = vsel %vm1182, %v1184, %v1180
  %v1186 = vmul.f32 1.0, %v1185
  %v1187 = vtanh.pop %v1167
  %v1188 = vmul.f32 %v1186, %v1134
  %1190 = vrot.lane.b32.xlu0 %v1187, 64
  %v1191 = vpop.permute.xlu0 %1190
  %v1193 = vmul.f32 %v1186, %v1191
  %1195 = vrot.lane.b32.xlu0 %v1193, 32
  %v1196 = vpop.permute.xlu0 %1195
  %v1198 = vadd.f32 %v1188, %v1196
  %v1199 = vtanh.pop %v1198
  %1201 = vrot.lane.b32.xlu0 %v1199, 64
  %v1202 = vpop.permute.xlu0 %1201
  %v1204 = vmul.f32 %v1186, %v1202
  %v1205 = vld [vmem:[%s601] sm:$0xff]
  %1207 = vrot.lane.b32.xlu0 %v1204, 32
  %v1208 = vpop.permute.xlu0 %1207
  %v1209 = vsel %vm48, %v1208, 0
  %1211 = vmatpush.msra.mxu0 0.0
  %1212 = vmatpush.msra.mxu0 0.0
  %1213 = vmatpush.msra.mxu0 0.0
  %1214 = vmatpush.msra.mxu0 0.0
  %1215 = vmatpush.msra.mxu0 0.0
  %1216 = vmatpush.msra.mxu0 0.0
  %1217 = vmatpush.msra.mxu0 0.0
  %1218 = vmatpush.msra.mxu0 0.0
  %1219 = vmatpush.msra.mxu0 0.0
  %1220 = vmatpush.msra.mxu0 0.0
  %1221 = vmatpush.msra.mxu0 0.0
  %1222 = vmatpush.msra.mxu0 0.0
  %1223 = vmatpush.msra.mxu0 %v761
  %1224 = vmatpush.msra.mxu0 %v760
  %1225 = vmatpush.msra.mxu0 %v759
  %1226 = vmatpush.msra.mxu0 %v758
  %1227 = vmatmul.f32.gmra.mxu0 %v1209
  %v1228 = vpop.f32.mrf.mxu0
  %v1229 = vadd.f32 0.0, %v1228
  %1230 = vdwg.mxu0
  %v1231 = vadd.f32 %v1205, %v1229
  %v1232 = vxor.u32 %v1231, 2147483648
  %v1233 = vmul.f32 %v1232, 1.442695
  %v1234 = vpow.pop %v1233
  %v1235 = vadd.f32 %v1234, 1.0
  %v1236 = vrcp.pop %v1235
  %v1237 = vmul.f32 %v1235, %v1236
  %v1238 = vsub.f32 1.0, %v1237
  %v1239 = vmul.f32 %v1236, %v1238
  %v1240 = vadd.f32 %v1236, %v1239
  %vm1241 = vweird.f32 %v1235
  %vm1242 = vweird.f32 %v1236
  %vm1243 = vmor %vm1241, %vm1242
  %v1244 = vsel %vm1243, %v1236, %v1240
  %v1245 = vand.u32 2147483647, %v1235
  %vm1246 = vcmp.eq.f32.partialorder %v1245, 8.507059e+37
  %v1247 = vand.u32 %v1235, 2147483648
  %v1248 = vor.u32 1.1754944e-38, %v1247
  %v1249 = vsel %vm1246, %v1248, %v1244
  %v1250 = vmul.f32 1.0, %v1249
  %v1251 = vtanh.pop %v1231
  %v1252 = vmul.f32 %v1250, %v1198
  %1254 = vrot.lane.b32.xlu0 %v1251, 64
  %v1255 = vpop.permute.xlu0 %1254
  %v1257 = vmul.f32 %v1250, %v1255
  %1259 = vrot.lane.b32.xlu0 %v1257, 32
  %v1260 = vpop.permute.xlu0 %1259
  %v1262 = vadd.f32 %v1252, %v1260
  %v1263 = vtanh.pop %v1262
  %1265 = vrot.lane.b32.xlu0 %v1263, 64
  %v1266 = vpop.permute.xlu0 %1265
  %v1268 = vmul.f32 %v1250, %v1266
  %v1269 = vld [vmem:[%s8] sm:$0x1]
  %v1270 = vld [vmem:[%s7] sm:$0xff]
  %v1271 = vld [vmem:[%s7 + $0x8] sm:$0xff]
  %v1272 = vld [vmem:[%s7 + $0x10] sm:$0xff]
  %v1273 = vld [vmem:[%s7 + $0x18] sm:$0xff]
  %v1274 = vsel %vm48, %v665, 0
  %1276 = vmatpush.msra.mxu0 0.0
  %1277 = vmatpush.msra.mxu0 0.0
  %1278 = vmatpush.msra.mxu0 0.0
  %1279 = vmatpush.msra.mxu0 0.0
  %1280 = vmatpush.msra.mxu0 0.0
  %1281 = vmatpush.msra.mxu0 0.0
  %1282 = vmatpush.msra.mxu0 0.0
  %1283 = vmatpush.msra.mxu0 0.0
  %1284 = vmatpush.msra.mxu0 0.0
  %1285 = vmatpush.msra.mxu0 0.0
  %1286 = vmatpush.msra.mxu0 0.0
  %1287 = vmatpush.msra.mxu0 0.0
  %1288 = vmatpush.msra.mxu0 %v1273
  %1289 = vmatpush.msra.mxu0 %v1272
  %1290 = vmatpush.msra.mxu0 %v1271
  %1291 = vmatpush.msra.mxu0 %v1270
  %1292 = vmatmul.f32.gmra.mxu0 %v1274
  %v1293 = vpop.f32.mrf.mxu0
  %v1294 = vadd.f32 0.0, %v1293
  %1295 = vdwg.mxu0
  %v1297 = vperm.slane %v1269, 0
  %v1299 = vadd.f32 %v1297, %v1294
  %v1300 = vld [vmem:[%s7 + $0x20] sm:$0xff]
  %v1301 = vld [vmem:[%s7 + $0x28] sm:$0xff]
  %v1302 = vld [vmem:[%s7 + $0x30] sm:$0xff]
  %v1303 = vld [vmem:[%s7 + $0x38] sm:$0xff]
  %1305 = vrot.lane.b32.xlu0 %v1268, 32
  %v1306 = vpop.permute.xlu0 %1305
  %v1307 = vsel %vm48, %v1306, 0
  %1309 = vmatpush.msra.mxu0 0.0
  %1310 = vmatpush.msra.mxu0 0.0
  %1311 = vmatpush.msra.mxu0 0.0
  %1312 = vmatpush.msra.mxu0 0.0
  %1313 = vmatpush.msra.mxu0 0.0
  %1314 = vmatpush.msra.mxu0 0.0
  %1315 = vmatpush.msra.mxu0 0.0
  %1316 = vmatpush.msra.mxu0 0.0
  %1317 = vmatpush.msra.mxu0 0.0
  %1318 = vmatpush.msra.mxu0 0.0
  %1319 = vmatpush.msra.mxu0 0.0
  %1320 = vmatpush.msra.mxu0 0.0
  %1321 = vmatpush.msra.mxu0 %v1303
  %1322 = vmatpush.msra.mxu0 %v1302
  %1323 = vmatpush.msra.mxu0 %v1301
  %1324 = vmatpush.msra.mxu0 %v1300
  %1325 = vmatmul.f32.gmra.mxu0 %v1307
  %v1326 = vpop.f32.mrf.mxu0
  %v1327 = vadd.f32 0.0, %v1326
  %1328 = vdwg.mxu0
  %v1329 = vadd.f32 %v1299, %v1327
  %vm1330 = vcmask 31744
  %v1331 = vsel %vm1330, %v1329, 0.0
  %1332 = vadd.xlane.f32.xlu0 %v1331
  %v1333 = vpop.xlane.xlu0 %1332
  %v1334 = vrcp.pop 4.0
  %v1335 = vmul.f32 4.0, %v1334
  %v1336 = vsub.f32 1.0, %v1335
  %v1337 = vmul.f32 %v1334, %v1336
  %v1338 = vadd.f32 %v1334, %v1337
  %vm1339 = vweird.f32 %v1334
  %v1340 = vsel %vm1339, %v1334, %v1338
  %v1341 = vmul.f32 %v1333, %v1340
  %v1342 = vsub.f32 %v1329, %v1341
  %v1343 = vmul.f32 %v1342, %v1342
  %v1344 = vsel %vm1330, %v1343, 0.0
  %1345 = vadd.xlane.f32.xlu0 %v1344
  %v1346 = vpop.xlane.xlu0 %1345
  %v1347 = vmul.f32 %v1346, %v1340
  %v1348 = vadd.f32 %v1347, 1e-05
  %v1349 = vrsqrt.pop %v1348
  %v1350 = vmul.f32 %v1349, %v1348
  %v1351 = vmul.f32 %v1350, %v1349
  %v1352 = vmul.f32 0.5, %v1351
  %v1353 = vsub.f32 1.5, %v1352
  %v1354 = vmul.f32 %v1349, %v1353
  %vm1355 = vweird.f32 %v1348
  %vm1356 = vweird.f32 %v1349
  %vm1357 = vmor %vm1355, %vm1356
  %v1358 = vsel %vm1357, %v1349, %v1354
  %v1359 = vmul.f32 %v1342, %v1358
  %v1360 = vsel %vm1330, %v1359, -inf
  %1361 = vmax.xlane.f32.xlu0 %v1360
  %v1362 = vpop.xlane.xlu0 %1361
  %v1363 = vsub.f32 %v1359, %v1362
  %v1364 = vmul.f32 %v1363, 1.442695
  %v1365 = vpow.pop %v1364
  %v1366 = vsel %vm1330, %v1365, 0.0
  %1367 = vadd.xlane.f32.xlu0 %v1366
  %v1368 = vpop.xlane.xlu0 %1367
  %v1369 = vlog2.pop %v1368
  %v1370 = vmul.f32 %v1369, 0.6931472
  %v1371 = vsub.f32 %v1363, %v1370
  %1372 = vst.msk [vmem:[%s9] sm:$0xff] %vm1330, %v1371
  // Predicated region
  $region38: #{text_sirnn_forward.1} parent=0 // pred_check
    _
  $region39: #{text_sirnn_forward.1} parent=0 // pred_check_branch
    %1374 = sbr.rel (0) target = $region41
  $region40: #{text_sirnn_forward.1} parent=0 // pred_region
    _
  $region41: #{text_sirnn_forward.1} parent=0 // pred_fallthru
    _
  // Predicated region
  $region42: #{text_sirnn_forward.1} parent=0 // pred_check
    _
  $region43: #{text_sirnn_forward.1} parent=0 // pred_check_branch
    %1376 = sbr.rel (0) target = $region45
  $region44: #{text_sirnn_forward.1} parent=0 // pred_region
    _
  $region45: #{text_sirnn_forward.1} parent=0 // pred_fallthru
    _

</llo_original>
